<compile_context>
chip_gen: v5e
topology: v5e:2x2
jax: 0.10.0
libtpu: 0.0.40
codegen_flags: <defaults>
</compile_context>

<pallas_src>
import math
import functools

import jax
import jax.numpy as jnp
from jax.experimental import pallas as pl
from jax.experimental.pallas import tpu as pltpu


# ---------------------------------------------------------------------------
# helpers
# ---------------------------------------------------------------------------
def _round_up(x, m):
    return ((x + m - 1) // m) * m


def _pick_tile(n, target):
    """Largest multiple of 128 <= target that divides n (n is a mult. of 128)."""
    t = min(target, n)
    while n % t:
        t -= 128
    return t


# ---------------------------------------------------------------------------
# Kernel 1: one LightGCN propagation step, fused with the running layer-sum.
#   h_new   = A_norm @ h
#   sum_new = (sum_in + h_new) * scale        (scale = 1/(L+1) on last layer)
# grid = (row_tiles, k_tiles); K is the reduction axis (last, "arbitrary").
# ---------------------------------------------------------------------------
def _make_lgconv_kernel(scale):
    def kernel(adj_ref, h_ref, sum_ref, h_out_ref, sum_out_ref, acc_ref):
        k = pl.program_id(1)

        @pl.when(k == 0)
        def _init():
            acc_ref[...] = jnp.zeros_like(acc_ref)

        acc_ref[...] += jnp.dot(adj_ref[...], h_ref[...],
                                preferred_element_type=jnp.float32)

        @pl.when(k == pl.num_programs(1) - 1)
        def _finalize():
            h_new = acc_ref[...]
            h_out_ref[...] = h_new
            s = sum_ref[...] + h_new
            if scale != 1.0:
                s = s * scale
            sum_out_ref[...] = s

    return kernel


def lgconv_step(adj_norm, h, layer_sum, *, scale, tm, tk):
    n, e = h.shape
    grid = (n // tm, n // tk)
    return pl.pallas_call(
        _make_lgconv_kernel(float(scale)),
        out_shape=(jax.ShapeDtypeStruct((n, e), jnp.float32),
                   jax.ShapeDtypeStruct((n, e), jnp.float32)),
        grid_spec=pltpu.PrefetchScalarGridSpec(
            num_scalar_prefetch=0,
            grid=grid,
            in_specs=[
                pl.BlockSpec((tm, tk), lambda i, k: (i, k)),   # A_norm tile
                pl.BlockSpec((tk, e), lambda i, k: (k, 0)),    # h (k-tiles)
                pl.BlockSpec((tm, e), lambda i, k: (i, 0)),    # running sum (resident)
            ],
            out_specs=[
                pl.BlockSpec((tm, e), lambda i, k: (i, 0)),    # h_new
                pl.BlockSpec((tm, e), lambda i, k: (i, 0)),    # sum_new
            ],
            scratch_shapes=[pltpu.VMEM((tm, e), jnp.float32)],
        ),
        compiler_params=pltpu.CompilerParams(
            dimension_semantics=("parallel", "arbitrary")),
        cost_estimate=pl.CostEstimate(
            flops=2 * n * n * e,
            transcendentals=0,
            bytes_accessed=4 * (n * n + 4 * n * e)),
    )(adj_norm, h, layer_sum)


def _propagate_branch(emb, adj_norm, num_layers, tm, tk):
    """LightGCN propagation + mean over (L+1) layer outputs (dropout = identity)."""
    if num_layers == 0:
        return emb
    h = emb
    layer_sum = emb
    inv = 1.0 / float(num_layers + 1)
    for layer in range(num_layers):
        scale = inv if layer == num_layers - 1 else 1.0
        h, layer_sum = lgconv_step(adj_norm, h, layer_sum, scale=scale, tm=tm, tk=tk)
    return layer_sum


# ---------------------------------------------------------------------------
# Kernel 2: fused scoring / loss reductions over row tiles.
# Inputs are the 4 gathered (R, E) embedding batches plus labels and {0,1}
# weights.  Outputs 6 scalar sums in SMEM:
#   [0] sum wc * BCE(score_c, y)     [1] sum wc * |sigmoid(score_c) - y|
#   [2] sum wt * BCE(score_t, y)     [3] sum wt * |sigmoid(score_t) - y|
#   [4] sum (Uc - Ut)^2              [5] sum (Ic - It)^2
# ---------------------------------------------------------------------------
def _loss_kernel(uc_ref, ic_ref, ut_ref, it_ref, y_ref, wc_ref, wt_ref,
                 out_ref, acc_ref):
    r = pl.program_id(0)

    @pl.when(r == 0)
    def _init():
        for j in range(6):
            acc_ref[j] = 0.0

    uc = uc_ref[...]
    ic = ic_ref[...]
    ut = ut_ref[...]
    it = it_ref[...]
    y = y_ref[...]
    wc = wc_ref[...]
    wt = wt_ref[...]

    def weighted_bce_and_dist(x, w):
        # numerically stable BCEWithLogits: max(x,0) - x*y + log1p(exp(-|x|))
        bce = jnp.maximum(x, 0.0) - x * y + jnp.log1p(jnp.exp(-jnp.abs(x)))
        sig = pl.reciprocal(1.0 + jnp.exp(-x), approx=True)
        return jnp.sum(w * bce), jnp.sum(w * jnp.abs(sig - y))

    xc = jnp.sum(uc * ic, axis=-1, keepdims=True)   # (TR, 1) control logits
    xt = jnp.sum(ut * it, axis=-1, keepdims=True)   # (TR, 1) treatment logits
    bce_c, dist_c = weighted_bce_and_dist(xc, wc)
    bce_t, dist_t = weighted_bce_and_dist(xt, wt)

    du = uc - ut
    di = ic - it

    acc_ref[0] += bce_c
    acc_ref[1] += dist_c
    acc_ref[2] += bce_t
    acc_ref[3] += dist_t
    acc_ref[4] += jnp.sum(du * du)
    acc_ref[5] += jnp.sum(di * di)

    @pl.when(r == pl.num_programs(0) - 1)
    def _finalize():
        for j in range(6):
            out_ref[j] = acc_ref[j]


def _loss_sums(uc, ic, ut, it, y, wc, wt, *, tr):
    r_pad, e_pad = uc.shape
    emb_spec = pl.BlockSpec((tr, e_pad), lambda r: (r, 0))
    col_spec = pl.BlockSpec((tr, 1), lambda r: (r, 0))
    return pl.pallas_call(
        _loss_kernel,
        out_shape=jax.ShapeDtypeStruct((6,), jnp.float32),
        grid=(r_pad // tr,),
        in_specs=[emb_spec, emb_spec, emb_spec, emb_spec,
                  col_spec, col_spec, col_spec],
        out_specs=pl.BlockSpec(memory_space=pltpu.SMEM),
        scratch_shapes=[pltpu.SMEM((6,), jnp.float32)],
        compiler_params=pltpu.CompilerParams(
            dimension_semantics=("arbitrary",)),
    )(uc, ic, ut, it, y, wc, wt)


# ---------------------------------------------------------------------------
# Full forward (jitted, no host round-trips)
# ---------------------------------------------------------------------------
def _lgncause_forward_impl(emb_control, emb_treatment, user, item, label, mask,
                           adj_control, adj_treatment, n_user, num_layers):
    n, e = emb_control.shape
    n_pad = _round_up(max(n, 128), 128)
    e_pad = _round_up(max(e, 128), 128)   # lane-dense embeddings (mult. of 128)
    tm = _pick_tile(n_pad, 256)
    tk = _pick_tile(n_pad, 512)

    def pad2(x, rows, cols):
        return jnp.pad(x, ((0, rows - x.shape[0]), (0, cols - x.shape[1])))

    emb_c = pad2(emb_control.astype(jnp.float32), n_pad, e_pad)
    emb_t = pad2(emb_treatment.astype(jnp.float32), n_pad, e_pad)
    adj_c = pad2(adj_control.astype(jnp.float32), n_pad, n_pad)
    adj_t = pad2(adj_treatment.astype(jnp.float32), n_pad, n_pad)

    def fold_norm(adj):
        # D^-1/2 A D^-1/2, computed ONCE (norm is constant across layers).
        deg = jnp.maximum(jnp.sum(adj, axis=1), 1.0)
        norm = deg ** -0.5
        return adj * norm[:, None] * norm[None, :]

    feats_c = _propagate_branch(emb_c, fold_norm(adj_c), num_layers, tm, tk)
    feats_t = _propagate_branch(emb_t, fold_norm(adj_t), num_layers, tm, tk)

    b, s = user.shape
    r = b * s
    u_idx = user.reshape(-1)
    i_idx = (item + n_user).reshape(-1)
    y = label.reshape(-1, 1).astype(jnp.float32)
    wt = jnp.broadcast_to(mask.astype(jnp.float32)[:, None], (b, s)).reshape(-1, 1)
    wc = 1.0 - wt
    cnt_c = jnp.sum(wc)
    cnt_t = jnp.sum(wt)

    # TODO(synk): gathers stay as XLA jnp.take (scalar-prefetch in-kernel gather
    #             would need 1-row blocks, which is slower at these shapes).
    uc = jnp.take(feats_c, u_idx, axis=0)
    ic = jnp.take(feats_c, i_idx, axis=0)
    ut = jnp.take(feats_t, u_idx, axis=0)
    it = jnp.take(feats_t, i_idx, axis=0)

    tr = min(512, _round_up(r, 8))
    r_pad = _round_up(r, tr)

    def pad_rows(x):
        return jnp.pad(x, ((0, r_pad - x.shape[0]), (0, 0)))

    sums = _loss_sums(pad_rows(uc), pad_rows(ic), pad_rows(ut), pad_rows(it),
                      pad_rows(y), pad_rows(wc), pad_rows(wt), tr=tr)

    control_loss = sums[0] / cnt_c
    control_distance = sums[1] / cnt_c
    treatment_loss = sums[2] / cnt_t
    treatment_distance = sums[3] / cnt_t
    mse_denom = jnp.float32(r * e)         # mean over the REAL embedding dim
    discrepancy_loss = sums[4] / mse_denom + sums[5] / mse_denom

    return (control_loss, treatment_loss, discrepancy_loss,
            control_distance, treatment_distance)


lgncause_forward = jax.jit(_lgncause_forward_impl, static_argnums=(8, 9))


# ---------------------------------------------------------------------------
if __name__ == "__main__":
    num_users, num_items = 48, 80
    embedding_size, num_layers = 32, 2
    N = num_users + num_items
    B, S = 8, 8

    key = jax.random.PRNGKey(0)
    k1, k2, k3, k4, k5, k6, k7 = jax.random.split(key, 7)

    # nn.Parameter init: uniform(-stdv, stdv), stdv = 1/sqrt(E)
    stdv = 1.0 / math.sqrt(embedding_size)
    emb_control = jax.random.uniform(k1, (N, embedding_size), jnp.float32, -stdv, stdv)
    emb_treatment = jax.random.uniform(k2, (N, embedding_size), jnp.float32, -stdv, stdv)

    # deterministic symmetric bipartite user-item graphs (dense adjacency)
    def make_adj(k):
        ui = (jax.random.uniform(k, (num_users, num_items)) < 0.1).astype(jnp.float32)
        top = jnp.concatenate([jnp.zeros((num_users, num_users), jnp.float32), ui], axis=1)
        bot = jnp.concatenate([ui.T, jnp.zeros((num_items, num_items), jnp.float32)], axis=1)
        return jnp.concatenate([top, bot], axis=0)

    adj_control = make_adj(k3)
    adj_treatment = make_adj(k4)

    user = jax.random.randint(k5, (B, S), 0, num_users)
    item = jax.random.randint(k6, (B, S), 0, num_items)
    label = jax.random.bernoulli(k7, 0.5, (B, S)).astype(jnp.float32)
    mask = jnp.array([False, True, False, True, False, False, True, False])  # (B,)

    out = lgncause_forward(emb_control, emb_treatment, user, item, label, mask,
                           adj_control, adj_treatment, num_users, num_layers)

    jax.block_until_ready(out)
    print("KERNEL_OK")
</pallas_src>

<mosaic_0001>
module attributes {stable_mosaic.version = 11 : i64} {
  func.func @kernel(%arg0: i32, %arg1: i32, %arg2: memref<128x128xf32, #tpu.memory_space<vmem>>, %arg3: memref<128x128xf32, #tpu.memory_space<vmem>>, %arg4: memref<128x128xf32, #tpu.memory_space<vmem>>, %arg5: memref<128x128xf32, #tpu.memory_space<vmem>>, %arg6: memref<128x128xf32, #tpu.memory_space<vmem>>, %arg7: memref<128x128xf32, #tpu.memory_space<vmem>>) attributes {dimension_semantics = [#tpu.dimension_semantics<parallel>, #tpu.dimension_semantics<arbitrary>], iteration_bounds = array<i64: 1, 1>, scalar_prefetch = 0 : i64, scratch_operands = 1 : i64, tpu.core_type = #tpu.core_type<tc>, window_params = [{transform_indices = @transform_0, window_bounds = array<i64: 128, 128>}, {transform_indices = @transform_1, window_bounds = array<i64: 128, 128>}, {transform_indices = @transform_2, window_bounds = array<i64: 128, 128>}, {transform_indices = @transform_3, window_bounds = array<i64: 128, 128>}, {transform_indices = @transform_4, window_bounds = array<i64: 128, 128>}]} {
    %c0_i32 = arith.constant 0 : i32
    %0 = arith.cmpi eq, %arg1, %c0_i32 : i32
    %1 = arith.extui %0 : i1 to i32
    %c0_i32_0 = arith.constant 0 : i32
    %2 = arith.cmpi ne, %1, %c0_i32_0 : i32
    scf.if %2 {
      %cst_10 = arith.constant 0.000000e+00 : f32
      %12 = vector.broadcast %cst_10 : f32 to vector<128x128xf32>
      %c0_11 = arith.constant 0 : index
      %c0_12 = arith.constant 0 : index
      %13 = vector.load %arg7[%c0_11, %c0_12] : memref<128x128xf32, #tpu.memory_space<vmem>>, vector<128x128xf32>
      tpu.vector_store %arg7[%c0_11, %c0_12], %12 {strides = array<i32>} : memref<128x128xf32, #tpu.memory_space<vmem>>, vector<128x128xf32>,
    } else {
    }
    %c0 = arith.constant 0 : index
    %c0_1 = arith.constant 0 : index
    %3 = vector.load %arg7[%c0, %c0_1] : memref<128x128xf32, #tpu.memory_space<vmem>>, vector<128x128xf32>
    %c0_2 = arith.constant 0 : index
    %c0_3 = arith.constant 0 : index
    %4 = vector.load %arg2[%c0_2, %c0_3] : memref<128x128xf32, #tpu.memory_space<vmem>>, vector<128x128xf32>
    %c0_4 = arith.constant 0 : index
    %c0_5 = arith.constant 0 : index
    %5 = vector.load %arg3[%c0_4, %c0_5] : memref<128x128xf32, #tpu.memory_space<vmem>>, vector<128x128xf32>
    %cst = arith.constant dense<0.000000e+00> : vector<128x128xf32>
    %6 = tpu.matmul %4, %5, %cst {dimension_numbers = #tpu.dot_dimension_numbers<[1], [0], [0], [1], [0, 0, 1, 1], [], []>} : vector<128x128xf32>, vector<128x128xf32>, vector<128x128xf32> -> vector<128x128xf32>
    %7 = arith.addf %3, %6 : vector<128x128xf32>
    %c0_6 = arith.constant 0 : index
    %c0_7 = arith.constant 0 : index
    %8 = vector.load %arg7[%c0_6, %c0_7] : memref<128x128xf32, #tpu.memory_space<vmem>>, vector<128x128xf32>
    tpu.vector_store %arg7[%c0_6, %c0_7], %7 {strides = array<i32>} : memref<128x128xf32, #tpu.memory_space<vmem>>, vector<128x128xf32>,
    %c0_i32_8 = arith.constant 0 : i32
    %9 = arith.cmpi eq, %arg1, %c0_i32_8 : i32
    %10 = arith.extui %9 : i1 to i32
    %c0_i32_9 = arith.constant 0 : i32
    %11 = arith.cmpi ne, %10, %c0_i32_9 : i32
    scf.if %11 {
      %c0_10 = arith.constant 0 : index
      %c0_11 = arith.constant 0 : index
      %12 = vector.load %arg7[%c0_10, %c0_11] : memref<128x128xf32, #tpu.memory_space<vmem>>, vector<128x128xf32>
      %c0_12 = arith.constant 0 : index
      %c0_13 = arith.constant 0 : index
      %13 = vector.load %arg5[%c0_12, %c0_13] : memref<128x128xf32, #tpu.memory_space<vmem>>, vector<128x128xf32>
      tpu.vector_store %arg5[%c0_12, %c0_13], %12 {strides = array<i32>} : memref<128x128xf32, #tpu.memory_space<vmem>>, vector<128x128xf32>,
      %c0_14 = arith.constant 0 : index
      %c0_15 = arith.constant 0 : index
      %14 = vector.load %arg4[%c0_14, %c0_15] : memref<128x128xf32, #tpu.memory_space<vmem>>, vector<128x128xf32>
      %15 = arith.addf %14, %12 : vector<128x128xf32>
      %c0_16 = arith.constant 0 : index
      %c0_17 = arith.constant 0 : index
      %16 = vector.load %arg6[%c0_16, %c0_17] : memref<128x128xf32, #tpu.memory_space<vmem>>, vector<128x128xf32>
      tpu.vector_store %arg6[%c0_16, %c0_17], %15 {strides = array<i32>} : memref<128x128xf32, #tpu.memory_space<vmem>>, vector<128x128xf32>,
    } else {
    }
    return
  }
  func.func @transform_0(%arg0: i32, %arg1: i32) -> (i32, i32) {
    %c0_i32 = arith.constant 0 : i32
    return %arg0, %arg1 : i32, i32
  }
  func.func @transform_1(%arg0: i32, %arg1: i32) -> (i32, i32) {
    %c0_i32 = arith.constant 0 : i32
    %c0_i32_0 = arith.constant 0 : i32
    return %arg1, %c0_i32 : i32, i32
  }
  func.func @transform_2(%arg0: i32, %arg1: i32) -> (i32, i32) {
    %c0_i32 = arith.constant 0 : i32
    %c0_i32_0 = arith.constant 0 : i32
    return %arg0, %c0_i32 : i32, i32
  }
  func.func @transform_3(%arg0: i32, %arg1: i32) -> (i32, i32) {
    %c0_i32 = arith.constant 0 : i32
    %c0_i32_0 = arith.constant 0 : i32
    return %arg0, %c0_i32 : i32, i32
  }
  func.func @transform_4(%arg0: i32, %arg1: i32) -> (i32, i32) {
    %c0_i32 = arith.constant 0 : i32
    %c0_i32_0 = arith.constant 0 : i32
    return %arg0, %c0_i32 : i32, i32
  }
}

module attributes {stable_mosaic.version = 11 : i64} {
  func.func @kernel(%arg0: i32, %arg1: i32, %arg2: memref<128x128xf32, #tpu.memory_space<vmem>>, %arg3: memref<128x128xf32, #tpu.memory_space<vmem>>, %arg4: memref<128x128xf32, #tpu.memory_space<vmem>>, %arg5: memref<128x128xf32, #tpu.memory_space<vmem>>, %arg6: memref<128x128xf32, #tpu.memory_space<vmem>>, %arg7: memref<128x128xf32, #tpu.memory_space<vmem>>) attributes {dimension_semantics = [#tpu.dimension_semantics<parallel>, #tpu.dimension_semantics<arbitrary>], iteration_bounds = array<i64: 1, 1>, scalar_prefetch = 0 : i64, scratch_operands = 1 : i64, tpu.core_type = #tpu.core_type<tc>, window_params = [{transform_indices = @transform_0, window_bounds = array<i64: 128, 128>}, {transform_indices = @transform_1, window_bounds = array<i64: 128, 128>}, {transform_indices = @transform_2, window_bounds = array<i64: 128, 128>}, {transform_indices = @transform_3, window_bounds = array<i64: 128, 128>}, {transform_indices = @transform_4, window_bounds = array<i64: 128, 128>}]} {
    %c0_i32 = arith.constant 0 : i32
    %0 = arith.cmpi eq, %arg1, %c0_i32 : i32
    %1 = arith.extui %0 : i1 to i32
    %c0_i32_0 = arith.constant 0 : i32
    %2 = arith.cmpi ne, %1, %c0_i32_0 : i32
    scf.if %2 {
      %cst_10 = arith.constant 0.000000e+00 : f32
      %12 = vector.broadcast %cst_10 : f32 to vector<128x128xf32>
      %c0_11 = arith.constant 0 : index
      %c0_12 = arith.constant 0 : index
      %13 = vector.load %arg7[%c0_11, %c0_12] : memref<128x128xf32, #tpu.memory_space<vmem>>, vector<128x128xf32>
      tpu.vector_store %arg7[%c0_11, %c0_12], %12 {strides = array<i32>} : memref<128x128xf32, #tpu.memory_space<vmem>>, vector<128x128xf32>,
    } else {
    }
    %c0 = arith.constant 0 : index
    %c0_1 = arith.constant 0 : index
    %3 = vector.load %arg7[%c0, %c0_1] : memref<128x128xf32, #tpu.memory_space<vmem>>, vector<128x128xf32>
    %c0_2 = arith.constant 0 : index
    %c0_3 = arith.constant 0 : index
    %4 = vector.load %arg2[%c0_2, %c0_3] : memref<128x128xf32, #tpu.memory_space<vmem>>, vector<128x128xf32>
    %c0_4 = arith.constant 0 : index
    %c0_5 = arith.constant 0 : index
    %5 = vector.load %arg3[%c0_4, %c0_5] : memref<128x128xf32, #tpu.memory_space<vmem>>, vector<128x128xf32>
    %cst = arith.constant dense<0.000000e+00> : vector<128x128xf32>
    %6 = tpu.matmul %4, %5, %cst {dimension_numbers = #tpu.dot_dimension_numbers<[1], [0], [0], [1], [0, 0, 1, 1], [], []>} : vector<128x128xf32>, vector<128x128xf32>, vector<128x128xf32> -> vector<128x128xf32>
    %7 = arith.addf %3, %6 : vector<128x128xf32>
    %c0_6 = arith.constant 0 : index
    %c0_7 = arith.constant 0 : index
    %8 = vector.load %arg7[%c0_6, %c0_7] : memref<128x128xf32, #tpu.memory_space<vmem>>, vector<128x128xf32>
    tpu.vector_store %arg7[%c0_6, %c0_7], %7 {strides = array<i32>} : memref<128x128xf32, #tpu.memory_space<vmem>>, vector<128x128xf32>,
    %c0_i32_8 = arith.constant 0 : i32
    %9 = arith.cmpi eq, %arg1, %c0_i32_8 : i32
    %10 = arith.extui %9 : i1 to i32
    %c0_i32_9 = arith.constant 0 : i32
    %11 = arith.cmpi ne, %10, %c0_i32_9 : i32
    scf.if %11 {
      %c0_10 = arith.constant 0 : index
      %c0_11 = arith.constant 0 : index
      %12 = vector.load %arg7[%c0_10, %c0_11] : memref<128x128xf32, #tpu.memory_space<vmem>>, vector<128x128xf32>
      %c0_12 = arith.constant 0 : index
      %c0_13 = arith.constant 0 : index
      %13 = vector.load %arg5[%c0_12, %c0_13] : memref<128x128xf32, #tpu.memory_space<vmem>>, vector<128x128xf32>
      tpu.vector_store %arg5[%c0_12, %c0_13], %12 {strides = array<i32>} : memref<128x128xf32, #tpu.memory_space<vmem>>, vector<128x128xf32>,
      %c0_14 = arith.constant 0 : index
      %c0_15 = arith.constant 0 : index
      %14 = vector.load %arg4[%c0_14, %c0_15] : memref<128x128xf32, #tpu.memory_space<vmem>>, vector<128x128xf32>
      %15 = arith.addf %14, %12 : vector<128x128xf32>
      %cst_16 = arith.constant 0.333333343 : f32
      %16 = vector.broadcast %cst_16 : f32 to vector<128x128xf32>
      %17 = arith.mulf %15, %16 : vector<128x128xf32>
      %c0_17 = arith.constant 0 : index
      %c0_18 = arith.constant 0 : index
      %18 = vector.load %arg6[%c0_17, %c0_18] : memref<128x128xf32, #tpu.memory_space<vmem>>, vector<128x128xf32>
      tpu.vector_store %arg6[%c0_17, %c0_18], %17 {strides = array<i32>} : memref<128x128xf32, #tpu.memory_space<vmem>>, vector<128x128xf32>,
    } else {
    }
    return
  }
  func.func @transform_0(%arg0: i32, %arg1: i32) -> (i32, i32) {
    %c0_i32 = arith.constant 0 : i32
    return %arg0, %arg1 : i32, i32
  }
  func.func @transform_1(%arg0: i32, %arg1: i32) -> (i32, i32) {
    %c0_i32 = arith.constant 0 : i32
    %c0_i32_0 = arith.constant 0 : i32
    return %arg1, %c0_i32 : i32, i32
  }
  func.func @transform_2(%arg0: i32, %arg1: i32) -> (i32, i32) {
    %c0_i32 = arith.constant 0 : i32
    %c0_i32_0 = arith.constant 0 : i32
    return %arg0, %c0_i32 : i32, i32
  }
  func.func @transform_3(%arg0: i32, %arg1: i32) -> (i32, i32) {
    %c0_i32 = arith.constant 0 : i32
    %c0_i32_0 = arith.constant 0 : i32
    return %arg0, %c0_i32 : i32, i32
  }
  func.func @transform_4(%arg0: i32, %arg1: i32) -> (i32, i32) {
    %c0_i32 = arith.constant 0 : i32
    %c0_i32_0 = arith.constant 0 : i32
    return %arg0, %c0_i32 : i32, i32
  }
}

module attributes {stable_mosaic.version = 11 : i64} {
  func.func @_loss_kernel(%arg0: i32, %arg1: memref<64x128xf32, #tpu.memory_space<vmem>>, %arg2: memref<64x128xf32, #tpu.memory_space<vmem>>, %arg3: memref<64x128xf32, #tpu.memory_space<vmem>>, %arg4: memref<64x128xf32, #tpu.memory_space<vmem>>, %arg5: memref<64x1xf32, #tpu.memory_space<vmem>>, %arg6: memref<64x1xf32, #tpu.memory_space<vmem>>, %arg7: memref<64x1xf32, #tpu.memory_space<vmem>>, %arg8: memref<6xf32, #tpu.memory_space<smem>>, %arg9: memref<6xf32, #tpu.memory_space<smem>>) attributes {dimension_semantics = [#tpu.dimension_semantics<arbitrary>], iteration_bounds = array<i64: 1>, scalar_prefetch = 0 : i64, scratch_operands = 1 : i64, tpu.core_type = #tpu.core_type<tc>, window_params = [{transform_indices = @transform_0, window_bounds = array<i64: 64, 128>}, {transform_indices = @transform_1, window_bounds = array<i64: 64, 128>}, {transform_indices = @transform_2, window_bounds = array<i64: 64, 128>}, {transform_indices = @transform_3, window_bounds = array<i64: 64, 128>}, {transform_indices = @transform_4, window_bounds = array<i64: 64, 1>}, {transform_indices = @transform_5, window_bounds = array<i64: 64, 1>}, {transform_indices = @transform_6, window_bounds = array<i64: 64, 1>}, {transform_indices = @transform_7, window_bounds = array<i64: 6>}]} {
    %c0_i32 = arith.constant 0 : i32
    %0 = arith.cmpi eq, %arg0, %c0_i32 : i32
    %1 = arith.extui %0 : i1 to i32
    %c0_i32_0 = arith.constant 0 : i32
    %2 = arith.cmpi ne, %1, %c0_i32_0 : i32
    scf.if %2 {
      %cst_38 = arith.constant 0.000000e+00 : f32
      %c0_39 = arith.constant 0 : index
      %105 = memref.load %arg9[%c0_39] : memref<6xf32, #tpu.memory_space<smem>>
      memref.store %cst_38, %arg9[%c0_39] : memref<6xf32, #tpu.memory_space<smem>>
      %cst_40 = arith.constant 0.000000e+00 : f32
      %c1_41 = arith.constant 1 : index
      %106 = memref.load %arg9[%c1_41] : memref<6xf32, #tpu.memory_space<smem>>
      memref.store %cst_40, %arg9[%c1_41] : memref<6xf32, #tpu.memory_space<smem>>
      %cst_42 = arith.constant 0.000000e+00 : f32
      %c2_43 = arith.constant 2 : index
      %107 = memref.load %arg9[%c2_43] : memref<6xf32, #tpu.memory_space<smem>>
      memref.store %cst_42, %arg9[%c2_43] : memref<6xf32, #tpu.memory_space<smem>>
      %cst_44 = arith.constant 0.000000e+00 : f32
      %c3_45 = arith.constant 3 : index
      %108 = memref.load %arg9[%c3_45] : memref<6xf32, #tpu.memory_space<smem>>
      memref.store %cst_44, %arg9[%c3_45] : memref<6xf32, #tpu.memory_space<smem>>
      %cst_46 = arith.constant 0.000000e+00 : f32
      %c4_47 = arith.constant 4 : index
      %109 = memref.load %arg9[%c4_47] : memref<6xf32, #tpu.memory_space<smem>>
      memref.store %cst_46, %arg9[%c4_47] : memref<6xf32, #tpu.memory_space<smem>>
      %cst_48 = arith.constant 0.000000e+00 : f32
      %c5_49 = arith.constant 5 : index
      %110 = memref.load %arg9[%c5_49] : memref<6xf32, #tpu.memory_space<smem>>
      memref.store %cst_48, %arg9[%c5_49] : memref<6xf32, #tpu.memory_space<smem>>
    } else {
    }
    %c0 = arith.constant 0 : index
    %c0_1 = arith.constant 0 : index
    %3 = vector.load %arg1[%c0, %c0_1] : memref<64x128xf32, #tpu.memory_space<vmem>>, vector<64x128xf32>
    %c0_2 = arith.constant 0 : index
    %c0_3 = arith.constant 0 : index
    %4 = vector.load %arg2[%c0_2, %c0_3] : memref<64x128xf32, #tpu.memory_space<vmem>>, vector<64x128xf32>
    %c0_4 = arith.constant 0 : index
    %c0_5 = arith.constant 0 : index
    %5 = vector.load %arg3[%c0_4, %c0_5] : memref<64x128xf32, #tpu.memory_space<vmem>>, vector<64x128xf32>
    %c0_6 = arith.constant 0 : index
    %c0_7 = arith.constant 0 : index
    %6 = vector.load %arg4[%c0_6, %c0_7] : memref<64x128xf32, #tpu.memory_space<vmem>>, vector<64x128xf32>
    %c0_8 = arith.constant 0 : index
    %c0_9 = arith.constant 0 : index
    %7 = vector.load %arg5[%c0_8, %c0_9] : memref<64x1xf32, #tpu.memory_space<vmem>>, vector<64x1xf32>
    %c0_10 = arith.constant 0 : index
    %c0_11 = arith.constant 0 : index
    %8 = vector.load %arg6[%c0_10, %c0_11] : memref<64x1xf32, #tpu.memory_space<vmem>>, vector<64x1xf32>
    %c0_12 = arith.constant 0 : index
    %c0_13 = arith.constant 0 : index
    %9 = vector.load %arg7[%c0_12, %c0_13] : memref<64x1xf32, #tpu.memory_space<vmem>>, vector<64x1xf32>
    %10 = arith.mulf %3, %4 : vector<64x128xf32>
    %cst = arith.constant dense<0.000000e+00> : vector<64xf32>
    %11 = vector.multi_reduction <add>, %10, %cst [1] : vector<64x128xf32> to vector<64xf32>
    %12 = vector.shape_cast %11 : vector<64xf32> to vector<64x1xf32>
    %13 = arith.mulf %5, %6 : vector<64x128xf32>
    %cst_14 = arith.constant dense<0.000000e+00> : vector<64xf32>
    %14 = vector.multi_reduction <add>, %13, %cst_14 [1] : vector<64x128xf32> to vector<64xf32>
    %15 = vector.shape_cast %14 : vector<64xf32> to vector<64x1xf32>
    %cst_15 = arith.constant 0.000000e+00 : f32
    %16 = vector.broadcast %cst_15 : f32 to vector<64x1xf32>
    %17 = arith.maximumf %12, %16 : vector<64x1xf32>
    %18 = arith.mulf %12, %7 : vector<64x1xf32>
    %19 = arith.subf %17, %18 : vector<64x1xf32>
    %20 = math.absf %12 : vector<64x1xf32>
    %cst_16 = arith.constant 0.000000e+00 : f32
    %21 = vector.broadcast %cst_16 : f32 to vector<64x1xf32>
    %22 = arith.subf %21, %20 : vector<64x1xf32>
    %23 = math.exp %22 : vector<64x1xf32>
    %24 = math.log1p %23 : vector<64x1xf32>
    %25 = arith.addf %19, %24 : vector<64x1xf32>
    %cst_17 = arith.constant 0.000000e+00 : f32
    %26 = vector.broadcast %cst_17 : f32 to vector<64x1xf32>
    %27 = arith.subf %26, %12 : vector<64x1xf32>
    %28 = math.exp %27 : vector<64x1xf32>
    %cst_18 = arith.constant 1.000000e+00 : f32
    %29 = vector.broadcast %cst_18 : f32 to vector<64x1xf32>
    %30 = arith.addf %29, %28 : vector<64x1xf32>
    %31 = tpu.reciprocal %30 {approx = true} : vector<64x1xf32> -> vector<64x1xf32>
    %32 = arith.mulf %8, %25 : vector<64x1xf32>
    %33 = vector.shape_cast %32 : vector<64x1xf32> to vector<1x64x1xf32>
    %cst_19 = arith.constant dense<0.000000e+00> : vector<1xf32>
    %34 = vector.multi_reduction <add>, %33, %cst_19 [1, 2] : vector<1x64x1xf32> to vector<1xf32>
    %35 = vector.shape_cast %34 : vector<1xf32> to vector<1x1x1xf32>
    %36 = vector.extract %35[0, 0, 0] : f32 from vector<1x1x1xf32>
    %37 = arith.subf %31, %7 : vector<64x1xf32>
    %38 = math.absf %37 : vector<64x1xf32>
    %39 = arith.mulf %8, %38 : vector<64x1xf32>
    %40 = vector.shape_cast %39 : vector<64x1xf32> to vector<1x64x1xf32>
    %cst_20 = arith.constant dense<0.000000e+00> : vector<1xf32>
    %41 = vector.multi_reduction <add>, %40, %cst_20 [1, 2] : vector<1x64x1xf32> to vector<1xf32>
    %42 = vector.shape_cast %41 : vector<1xf32> to vector<1x1x1xf32>
    %43 = vector.extract %42[0, 0, 0] : f32 from vector<1x1x1xf32>
    %cst_21 = arith.constant 0.000000e+00 : f32
    %44 = vector.broadcast %cst_21 : f32 to vector<64x1xf32>
    %45 = arith.maximumf %15, %44 : vector<64x1xf32>
    %46 = arith.mulf %15, %7 : vector<64x1xf32>
    %47 = arith.subf %45, %46 : vector<64x1xf32>
    %48 = math.absf %15 : vector<64x1xf32>
    %cst_22 = arith.constant 0.000000e+00 : f32
    %49 = vector.broadcast %cst_22 : f32 to vector<64x1xf32>
    %50 = arith.subf %49, %48 : vector<64x1xf32>
    %51 = math.exp %50 : vector<64x1xf32>
    %52 = math.log1p %51 : vector<64x1xf32>
    %53 = arith.addf %47, %52 : vector<64x1xf32>
    %cst_23 = arith.constant 0.000000e+00 : f32
    %54 = vector.broadcast %cst_23 : f32 to vector<64x1xf32>
    %55 = arith.subf %54, %15 : vector<64x1xf32>
    %56 = math.exp %55 : vector<64x1xf32>
    %cst_24 = arith.constant 1.000000e+00 : f32
    %57 = vector.broadcast %cst_24 : f32 to vector<64x1xf32>
    %58 = arith.addf %57, %56 : vector<64x1xf32>
    %59 = tpu.reciprocal %58 {approx = true} : vector<64x1xf32> -> vector<64x1xf32>
    %60 = arith.mulf %9, %53 : vector<64x1xf32>
    %61 = vector.shape_cast %60 : vector<64x1xf32> to vector<1x64x1xf32>
    %cst_25 = arith.constant dense<0.000000e+00> : vector<1xf32>
    %62 = vector.multi_reduction <add>, %61, %cst_25 [1, 2] : vector<1x64x1xf32> to vector<1xf32>
    %63 = vector.shape_cast %62 : vector<1xf32> to vector<1x1x1xf32>
    %64 = vector.extract %63[0, 0, 0] : f32 from vector<1x1x1xf32>
    %65 = arith.subf %59, %7 : vector<64x1xf32>
    %66 = math.absf %65 : vector<64x1xf32>
    %67 = arith.mulf %9, %66 : vector<64x1xf32>
    %68 = vector.shape_cast %67 : vector<64x1xf32> to vector<1x64x1xf32>
    %cst_26 = arith.constant dense<0.000000e+00> : vector<1xf32>
    %69 = vector.multi_reduction <add>, %68, %cst_26 [1, 2] : vector<1x64x1xf32> to vector<1xf32>
    %70 = vector.shape_cast %69 : vector<1xf32> to vector<1x1x1xf32>
    %71 = vector.extract %70[0, 0, 0] : f32 from vector<1x1x1xf32>
    %72 = arith.subf %3, %5 : vector<64x128xf32>
    %73 = arith.subf %4, %6 : vector<64x128xf32>
    %c0_27 = arith.constant 0 : index
    %74 = memref.load %arg9[%c0_27] : memref<6xf32, #tpu.memory_space<smem>>
    %75 = arith.addf %74, %36 : f32
    %c0_28 = arith.constant 0 : index
    %76 = memref.load %arg9[%c0_28] : memref<6xf32, #tpu.memory_space<smem>>
    memref.store %75, %arg9[%c0_28] : memref<6xf32, #tpu.memory_space<smem>>
    %c1 = arith.constant 1 : index
    %77 = memref.load %arg9[%c1] : memref<6xf32, #tpu.memory_space<smem>>
    %78 = arith.addf %77, %43 : f32
    %c1_29 = arith.constant 1 : index
    %79 = memref.load %arg9[%c1_29] : memref<6xf32, #tpu.memory_space<smem>>
    memref.store %78, %arg9[%c1_29] : memref<6xf32, #tpu.memory_space<smem>>
    %c2 = arith.constant 2 : index
    %80 = memref.load %arg9[%c2] : memref<6xf32, #tpu.memory_space<smem>>
    %81 = arith.addf %80, %64 : f32
    %c2_30 = arith.constant 2 : index
    %82 = memref.load %arg9[%c2_30] : memref<6xf32, #tpu.memory_space<smem>>
    memref.store %81, %arg9[%c2_30] : memref<6xf32, #tpu.memory_space<smem>>
    %c3 = arith.constant 3 : index
    %83 = memref.load %arg9[%c3] : memref<6xf32, #tpu.memory_space<smem>>
    %84 = arith.addf %83, %71 : f32
    %c3_31 = arith.constant 3 : index
    %85 = memref.load %arg9[%c3_31] : memref<6xf32, #tpu.memory_space<smem>>
    memref.store %84, %arg9[%c3_31] : memref<6xf32, #tpu.memory_space<smem>>
    %c4 = arith.constant 4 : index
    %86 = memref.load %arg9[%c4] : memref<6xf32, #tpu.memory_space<smem>>
    %87 = arith.mulf %72, %72 : vector<64x128xf32>
    %88 = vector.shape_cast %87 : vector<64x128xf32> to vector<1x64x128xf32>
    %cst_32 = arith.constant dense<0.000000e+00> : vector<1xf32>
    %89 = vector.multi_reduction <add>, %88, %cst_32 [1, 2] : vector<1x64x128xf32> to vector<1xf32>
    %90 = vector.shape_cast %89 : vector<1xf32> to vector<1x1x1xf32>
    %91 = vector.extract %90[0, 0, 0] : f32 from vector<1x1x1xf32>
    %92 = arith.addf %86, %91 : f32
    %c4_33 = arith.constant 4 : index
    %93 = memref.load %arg9[%c4_33] : memref<6xf32, #tpu.memory_space<smem>>
    memref.store %92, %arg9[%c4_33] : memref<6xf32, #tpu.memory_space<smem>>
    %c5 = arith.constant 5 : index
    %94 = memref.load %arg9[%c5] : memref<6xf32, #tpu.memory_space<smem>>
    %95 = arith.mulf %73, %73 : vector<64x128xf32>
    %96 = vector.shape_cast %95 : vector<64x128xf32> to vector<1x64x128xf32>
    %cst_34 = arith.constant dense<0.000000e+00> : vector<1xf32>
    %97 = vector.multi_reduction <add>, %96, %cst_34 [1, 2] : vector<1x64x128xf32> to vector<1xf32>
    %98 = vector.shape_cast %97 : vector<1xf32> to vector<1x1x1xf32>
    %99 = vector.extract %98[0, 0, 0] : f32 from vector<1x1x1xf32>
    %100 = arith.addf %94, %99 : f32
    %c5_35 = arith.constant 5 : index
    %101 = memref.load %arg9[%c5_35] : memref<6xf32, #tpu.memory_space<smem>>
    memref.store %100, %arg9[%c5_35] : memref<6xf32, #tpu.memory_space<smem>>
    %c0_i32_36 = arith.constant 0 : i32
    %102 = arith.cmpi eq, %arg0, %c0_i32_36 : i32
    %103 = arith.extui %102 : i1 to i32
    %c0_i32_37 = arith.constant 0 : i32
    %104 = arith.cmpi ne, %103, %c0_i32_37 : i32
    scf.if %104 {
      %c0_38 = arith.constant 0 : index
      %105 = memref.load %arg9[%c0_38] : memref<6xf32, #tpu.memory_space<smem>>
      %c0_39 = arith.constant 0 : index
      %106 = memref.load %arg8[%c0_39] : memref<6xf32, #tpu.memory_space<smem>>
      memref.store %105, %arg8[%c0_39] : memref<6xf32, #tpu.memory_space<smem>>
      %c1_40 = arith.constant 1 : index
      %107 = memref.load %arg9[%c1_40] : memref<6xf32, #tpu.memory_space<smem>>
      %c1_41 = arith.constant 1 : index
      %108 = memref.load %arg8[%c1_41] : memref<6xf32, #tpu.memory_space<smem>>
      memref.store %107, %arg8[%c1_41] : memref<6xf32, #tpu.memory_space<smem>>
      %c2_42 = arith.constant 2 : index
      %109 = memref.load %arg9[%c2_42] : memref<6xf32, #tpu.memory_space<smem>>
      %c2_43 = arith.constant 2 : index
      %110 = memref.load %arg8[%c2_43] : memref<6xf32, #tpu.memory_space<smem>>
      memref.store %109, %arg8[%c2_43] : memref<6xf32, #tpu.memory_space<smem>>
      %c3_44 = arith.constant 3 : index
      %111 = memref.load %arg9[%c3_44] : memref<6xf32, #tpu.memory_space<smem>>
      %c3_45 = arith.constant 3 : index
      %112 = memref.load %arg8[%c3_45] : memref<6xf32, #tpu.memory_space<smem>>
      memref.store %111, %arg8[%c3_45] : memref<6xf32, #tpu.memory_space<smem>>
      %c4_46 = arith.constant 4 : index
      %113 = memref.load %arg9[%c4_46] : memref<6xf32, #tpu.memory_space<smem>>
      %c4_47 = arith.constant 4 : index
      %114 = memref.load %arg8[%c4_47] : memref<6xf32, #tpu.memory_space<smem>>
      memref.store %113, %arg8[%c4_47] : memref<6xf32, #tpu.memory_space<smem>>
      %c5_48 = arith.constant 5 : index
      %115 = memref.load %arg9[%c5_48] : memref<6xf32, #tpu.memory_space<smem>>
      %c5_49 = arith.constant 5 : index
      %116 = memref.load %arg8[%c5_49] : memref<6xf32, #tpu.memory_space<smem>>
      memref.store %115, %arg8[%c5_49] : memref<6xf32, #tpu.memory_space<smem>>
    } else {
    }
    return
  }
  func.func @transform_0(%arg0: i32) -> (i32, i32) {
    %c0_i32 = arith.constant 0 : i32
    %c0_i32_0 = arith.constant 0 : i32
    return %arg0, %c0_i32 : i32, i32
  }
  func.func @transform_1(%arg0: i32) -> (i32, i32) {
    %c0_i32 = arith.constant 0 : i32
    %c0_i32_0 = arith.constant 0 : i32
    return %arg0, %c0_i32 : i32, i32
  }
  func.func @transform_2(%arg0: i32) -> (i32, i32) {
    %c0_i32 = arith.constant 0 : i32
    %c0_i32_0 = arith.constant 0 : i32
    return %arg0, %c0_i32 : i32, i32
  }
  func.func @transform_3(%arg0: i32) -> (i32, i32) {
    %c0_i32 = arith.constant 0 : i32
    %c0_i32_0 = arith.constant 0 : i32
    return %arg0, %c0_i32 : i32, i32
  }
  func.func @transform_4(%arg0: i32) -> (i32, i32) {
    %c0_i32 = arith.constant 0 : i32
    %c0_i32_0 = arith.constant 0 : i32
    return %arg0, %c0_i32 : i32, i32
  }
  func.func @transform_5(%arg0: i32) -> (i32, i32) {
    %c0_i32 = arith.constant 0 : i32
    %c0_i32_0 = arith.constant 0 : i32
    return %arg0, %c0_i32 : i32, i32
  }
  func.func @transform_6(%arg0: i32) -> (i32, i32) {
    %c0_i32 = arith.constant 0 : i32
    %c0_i32_0 = arith.constant 0 : i32
    return %arg0, %c0_i32 : i32, i32
  }
  func.func @transform_7(%arg0: i32) -> i32 {
    %c0_i32 = arith.constant 0 : i32
    %c0_i32_0 = arith.constant 0 : i32
    return %c0_i32 : i32
  }
}

</mosaic_0001>

<llo_original>
// kernel: _lgncause_forward_impl.6
$region0: #{_lgncause_forward_impl.6}
  #allocation0 [shape = 'u32[]', space=smem, size = 0x4, offset = 0x4, fixed_abs, tag = 'smem constant byte address 0x4 - core index']
  #allocation1 [shape = 'u32[72,128]{1,0:T(1,128)}', space=vmem, size = 0x9000, scoped, tag = 'internal scratch']
  #allocation2 [shape = 'f32[128,128]{1,0:T(8,128)}', space=vmem, size = 0x10000, scoped, tag = 'scratch operand']
  %s0 = inlined_call_operand.vmem [shape: f32[128,128], index: 0, kind: input, shape index: {}]
  %s1 = inlined_call_operand.vmem [shape: f32[128,128], index: 1, kind: input, shape index: {}]
  %s2 = inlined_call_operand.vmem [shape: f32[128,128], index: 2, kind: input, shape index: {}]
  %s3 = inlined_call_operand.hbm [shape: f32[128,128], index: 3, kind: output, shape index: {0}]
  %s4 = inlined_call_operand.vmem [shape: f32[128,128], index: 4, kind: output, shape index: {1}]
  %5 = xla_tuple %s3, %s4
  %s6 = sld [smem:[#allocation0]]
  $region38: #{_lgncause_forward_impl.6} parent=0
    _
  %s8 = ssub.s32 1, %s6
  %s9 = scalar_select 0, %s8, %s6
  $region1: #{_lgncause_forward_impl.6} parent=0
    #allocation3 [shape = 'u8[65536]{0}', space=vmem, size = 0x10000, scoped, tag = 'output window, operand 0, single buffered']
    #allocation4 [shape = 's32[1]{0}', space=sflag, size = 0x4, scoped, tag = 'scoped memory for _lgncause_forward_impl.6']
    %10 = vsyncpa [#allocation4], 0
    // Predicated region
    $region2: #{_lgncause_forward_impl.6} parent=1 // pred_check
      _
    $region3: #{_lgncause_forward_impl.6} parent=1 // pred_check_branch
      %12 = sbr.rel (0) target = $region5
    $region4: #{_lgncause_forward_impl.6} parent=1 // pred_region
      _
    $region5: #{_lgncause_forward_impl.6} parent=1 // pred_fallthru
      _
    // Predicated region
    $region6: #{_lgncause_forward_impl.6} parent=1 // pred_check
      _
    $region7: #{_lgncause_forward_impl.6} parent=1 // pred_check_branch
      %14 = sbr.rel (0) target = $region9
    $region8: #{_lgncause_forward_impl.6} parent=1 // pred_region
      _
    $region9: #{_lgncause_forward_impl.6} parent=1 // pred_fallthru
      _
    // Predicated region
    $region10: #{_lgncause_forward_impl.6} parent=1 // pred_check
      _
    $region11: #{_lgncause_forward_impl.6} parent=1 // pred_check_branch
      %16 = sbr.rel (0) target = $region13
    $region12: #{_lgncause_forward_impl.6} parent=1 // pred_region
      _
    $region13: #{_lgncause_forward_impl.6} parent=1 // pred_fallthru
      _
    %p17 = scmp.eq.s32.totalorder 0, 0
    // Predicated region
    $region14: #{_lgncause_forward_impl.6} parent=1 // pred_check
      %p18 = pneg %p17
    $region15: #{_lgncause_forward_impl.6} parent=1 // pred_check_branch
      %20 = sbr.rel (%p18) target = $region17
    $region16: #{_lgncause_forward_impl.6} parent=1 // pred_region
      %21 = vst [vmem:[#allocation2] sm:$0xff] 0.0
      %22 = vst [vmem:[#allocation2 + $0x8] sm:$0xff] 0.0
      %23 = vst [vmem:[#allocation2 + $0x10] sm:$0xff] 0.0
      %24 = vst [vmem:[#allocation2 + $0x18] sm:$0xff] 0.0
      %25 = vst [vmem:[#allocation2 + $0x20] sm:$0xff] 0.0
      %26 = vst [vmem:[#allocation2 + $0x28] sm:$0xff] 0.0
      %27 = vst [vmem:[#allocation2 + $0x30] sm:$0xff] 0.0
      %28 = vst [vmem:[#allocation2 + $0x38] sm:$0xff] 0.0
      %29 = vst [vmem:[#allocation2 + $0x40] sm:$0xff] 0.0
      %30 = vst [vmem:[#allocation2 + $0x48] sm:$0xff] 0.0
      %31 = vst [vmem:[#allocation2 + $0x50] sm:$0xff] 0.0
      %32 = vst [vmem:[#allocation2 + $0x58] sm:$0xff] 0.0
      %33 = vst [vmem:[#allocation2 + $0x60] sm:$0xff] 0.0
      %34 = vst [vmem:[#allocation2 + $0x68] sm:$0xff] 0.0
      %35 = vst [vmem:[#allocation2 + $0x70] sm:$0xff] 0.0
      %36 = vst [vmem:[#allocation2 + $0x78] sm:$0xff] 0.0
    $region17: #{_lgncause_forward_impl.6} parent=1 // pred_fallthru
      _
    %v37 = vld [vmem:[#allocation2] sm:$0xff]
    %v38 = vld [vmem:[#allocation2 + $0x8] sm:$0xff]
    %v39 = vld [vmem:[#allocation2 + $0x10] sm:$0xff]
    %v40 = vld [vmem:[#allocation2 + $0x18] sm:$0xff]
    %v41 = vld [vmem:[#allocation2 + $0x20] sm:$0xff]
    %v42 = vld [vmem:[#allocation2 + $0x28] sm:$0xff]
    %v43 = vld [vmem:[#allocation2 + $0x30] sm:$0xff]
    %v44 = vld [vmem:[#allocation2 + $0x38] sm:$0xff]
    %v45 = vld [vmem:[#allocation2 + $0x40] sm:$0xff]
    %v46 = vld [vmem:[#allocation2 + $0x48] sm:$0xff]
    %v47 = vld [vmem:[#allocation2 + $0x50] sm:$0xff]
    %v48 = vld [vmem:[#allocation2 + $0x58] sm:$0xff]
    %v49 = vld [vmem:[#allocation2 + $0x60] sm:$0xff]
    %v50 = vld [vmem:[#allocation2 + $0x68] sm:$0xff]
    %v51 = vld [vmem:[#allocation2 + $0x70] sm:$0xff]
    %v52 = vld [vmem:[#allocation2 + $0x78] sm:$0xff]
    %v53 = vld [vmem:[%s0] sm:$0xff]
    %v54 = vld [vmem:[%s0 + $0x8] sm:$0xff]
    %v55 = vld [vmem:[%s0 + $0x10] sm:$0xff]
    %v56 = vld [vmem:[%s0 + $0x18] sm:$0xff]
    %v57 = vld [vmem:[%s0 + $0x20] sm:$0xff]
    %v58 = vld [vmem:[%s0 + $0x28] sm:$0xff]
    %v59 = vld [vmem:[%s0 + $0x30] sm:$0xff]
    %v60 = vld [vmem:[%s0 + $0x38] sm:$0xff]
    %v61 = vld [vmem:[%s0 + $0x40] sm:$0xff]
    %v62 = vld [vmem:[%s0 + $0x48] sm:$0xff]
    %v63 = vld [vmem:[%s0 + $0x50] sm:$0xff]
    %v64 = vld [vmem:[%s0 + $0x58] sm:$0xff]
    %v65 = vld [vmem:[%s0 + $0x60] sm:$0xff]
    %v66 = vld [vmem:[%s0 + $0x68] sm:$0xff]
    %v67 = vld [vmem:[%s0 + $0x70] sm:$0xff]
    %v68 = vld [vmem:[%s0 + $0x78] sm:$0xff]
    %v69 = vld [vmem:[%s1] sm:$0xff]
    %v70 = vld [vmem:[%s1 + $0x8] sm:$0xff]
    %v71 = vld [vmem:[%s1 + $0x10] sm:$0xff]
    %v72 = vld [vmem:[%s1 + $0x18] sm:$0xff]
    %v73 = vld [vmem:[%s1 + $0x20] sm:$0xff]
    %v74 = vld [vmem:[%s1 + $0x28] sm:$0xff]
    %v75 = vld [vmem:[%s1 + $0x30] sm:$0xff]
    %v76 = vld [vmem:[%s1 + $0x38] sm:$0xff]
    %v77 = vld [vmem:[%s1 + $0x40] sm:$0xff]
    %v78 = vld [vmem:[%s1 + $0x48] sm:$0xff]
    %v79 = vld [vmem:[%s1 + $0x50] sm:$0xff]
    %v80 = vld [vmem:[%s1 + $0x58] sm:$0xff]
    %v81 = vld [vmem:[%s1 + $0x60] sm:$0xff]
    %v82 = vld [vmem:[%s1 + $0x68] sm:$0xff]
    %v83 = vld [vmem:[%s1 + $0x70] sm:$0xff]
    %v84 = vld [vmem:[%s1 + $0x78] sm:$0xff]
    %85 = vmatpush.msra.mxu0 %v84
    %86 = vmatpush.msra.mxu0 %v83
    %87 = vmatpush.msra.mxu0 %v82
    %88 = vmatpush.msra.mxu0 %v81
    %89 = vmatpush.msra.mxu0 %v80
    %90 = vmatpush.msra.mxu0 %v79
    %91 = vmatpush.msra.mxu0 %v78
    %92 = vmatpush.msra.mxu0 %v77
    %93 = vmatpush.msra.mxu0 %v76
    %94 = vmatpush.msra.mxu0 %v75
    %95 = vmatpush.msra.mxu0 %v74
    %96 = vmatpush.msra.mxu0 %v73
    %97 = vmatpush.msra.mxu0 %v72
    %98 = vmatpush.msra.mxu0 %v71
    %99 = vmatpush.msra.mxu0 %v70
    %100 = vmatpush.msra.mxu0 %v69
    %101 = vmatmul.f32.gmra.mxu0 %v53
    %v102 = vpop.f32.mrf.mxu0
    %v103 = vadd.f32 0.0, %v102
    %104 = vmatmul.f32.gmra.mxu0 %v54
    %v105 = vpop.f32.mrf.mxu0
    %v106 = vadd.f32 0.0, %v105
    %107 = vmatmul.f32.gmra.mxu0 %v55
    %v108 = vpop.f32.mrf.mxu0
    %v109 = vadd.f32 0.0, %v108
    %110 = vmatmul.f32.gmra.mxu0 %v56
    %v111 = vpop.f32.mrf.mxu0
    %v112 = vadd.f32 0.0, %v111
    %113 = vmatmul.f32.gmra.mxu0 %v57
    %v114 = vpop.f32.mrf.mxu0
    %v115 = vadd.f32 0.0, %v114
    %116 = vmatmul.f32.gmra.mxu0 %v58
    %v117 = vpop.f32.mrf.mxu0
    %v118 = vadd.f32 0.0, %v117
    %119 = vmatmul.f32.gmra.mxu0 %v59
    %v120 = vpop.f32.mrf.mxu0
    %v121 = vadd.f32 0.0, %v120
    %122 = vmatmul.f32.gmra.mxu0 %v60
    %v123 = vpop.f32.mrf.mxu0
    %v124 = vadd.f32 0.0, %v123
    %125 = vmatmul.f32.gmra.mxu0 %v61
    %v126 = vpop.f32.mrf.mxu0
    %v127 = vadd.f32 0.0, %v126
    %128 = vmatmul.f32.gmra.mxu0 %v62
    %v129 = vpop.f32.mrf.mxu0
    %v130 = vadd.f32 0.0, %v129
    %131 = vmatmul.f32.gmra.mxu0 %v63
    %v132 = vpop.f32.mrf.mxu0
    %v133 = vadd.f32 0.0, %v132
    %134 = vmatmul.f32.gmra.mxu0 %v64
    %v135 = vpop.f32.mrf.mxu0
    %v136 = vadd.f32 0.0, %v135
    %137 = vmatmul.f32.gmra.mxu0 %v65
    %v138 = vpop.f32.mrf.mxu0
    %v139 = vadd.f32 0.0, %v138
    %140 = vmatmul.f32.gmra.mxu0 %v66
    %v141 = vpop.f32.mrf.mxu0
    %v142 = vadd.f32 0.0, %v141
    %143 = vmatmul.f32.gmra.mxu0 %v67
    %v144 = vpop.f32.mrf.mxu0
    %v145 = vadd.f32 0.0, %v144
    %146 = vmatmul.f32.gmra.mxu0 %v68
    %v147 = vpop.f32.mrf.mxu0
    %v148 = vadd.f32 0.0, %v147
    %149 = vdwg.mxu0
    %v150 = vadd.f32 %v37, %v103
    %v151 = vadd.f32 %v38, %v106
    %v152 = vadd.f32 %v39, %v109
    %v153 = vadd.f32 %v40, %v112
    %v154 = vadd.f32 %v41, %v115
    %v155 = vadd.f32 %v42, %v118
    %v156 = vadd.f32 %v43, %v121
    %v157 = vadd.f32 %v44, %v124
    %v158 = vadd.f32 %v45, %v127
    %v159 = vadd.f32 %v46, %v130
    %v160 = vadd.f32 %v47, %v133
    %v161 = vadd.f32 %v48, %v136
    %v162 = vadd.f32 %v49, %v139
    %v163 = vadd.f32 %v50, %v142
    %v164 = vadd.f32 %v51, %v145
    %v165 = vadd.f32 %v52, %v148
    %166 = vst [vmem:[#allocation2] sm:$0xff] %v150
    %167 = vst [vmem:[#allocation2 + $0x8] sm:$0xff] %v151
    %168 = vst [vmem:[#allocation2 + $0x10] sm:$0xff] %v152
    %169 = vst [vmem:[#allocation2 + $0x18] sm:$0xff] %v153
    %170 = vst [vmem:[#allocation2 + $0x20] sm:$0xff] %v154
    %171 = vst [vmem:[#allocation2 + $0x28] sm:$0xff] %v155
    %172 = vst [vmem:[#allocation2 + $0x30] sm:$0xff] %v156
    %173 = vst [vmem:[#allocation2 + $0x38] sm:$0xff] %v157
    %174 = vst [vmem:[#allocation2 + $0x40] sm:$0xff] %v158
    %175 = vst [vmem:[#allocation2 + $0x48] sm:$0xff] %v159
    %176 = vst [vmem:[#allocation2 + $0x50] sm:$0xff] %v160
    %177 = vst [vmem:[#allocation2 + $0x58] sm:$0xff] %v161
    %178 = vst [vmem:[#allocation2 + $0x60] sm:$0xff] %v162
    %179 = vst [vmem:[#allocation2 + $0x68] sm:$0xff] %v163
    %180 = vst [vmem:[#allocation2 + $0x70] sm:$0xff] %v164
    %181 = vst [vmem:[#allocation2 + $0x78] sm:$0xff] %v165
    // Predicated region
    $region18: #{_lgncause_forward_impl.6} parent=1 // pred_check
      %p182 = pneg %p17
    $region19: #{_lgncause_forward_impl.6} parent=1 // pred_check_branch
      %184 = sbr.rel (%p182) target = $region21
    $region20: #{_lgncause_forward_impl.6} parent=1 // pred_region
      %v185 = vld [vmem:[#allocation2] sm:$0xff]
      %v186 = vld [vmem:[#allocation2 + $0x8] sm:$0xff]
      %v187 = vld [vmem:[#allocation2 + $0x10] sm:$0xff]
      %v188 = vld [vmem:[#allocation2 + $0x18] sm:$0xff]
      %v189 = vld [vmem:[#allocation2 + $0x20] sm:$0xff]
      %v190 = vld [vmem:[#allocation2 + $0x28] sm:$0xff]
      %v191 = vld [vmem:[#allocation2 + $0x30] sm:$0xff]
      %v192 = vld [vmem:[#allocation2 + $0x38] sm:$0xff]
      %v193 = vld [vmem:[#allocation2 + $0x40] sm:$0xff]
      %v194 = vld [vmem:[#allocation2 + $0x48] sm:$0xff]
      %v195 = vld [vmem:[#allocation2 + $0x50] sm:$0xff]
      %v196 = vld [vmem:[#allocation2 + $0x58] sm:$0xff]
      %v197 = vld [vmem:[#allocation2 + $0x60] sm:$0xff]
      %v198 = vld [vmem:[#allocation2 + $0x68] sm:$0xff]
      %v199 = vld [vmem:[#allocation2 + $0x70] sm:$0xff]
      %v200 = vld [vmem:[#allocation2 + $0x78] sm:$0xff]
      %201 = vst [vmem:[#allocation3] sm:$0xff] %v185
      %202 = vst [vmem:[#allocation3 + $0x8] sm:$0xff] %v186
      %203 = vst [vmem:[#allocation3 + $0x10] sm:$0xff] %v187
      %204 = vst [vmem:[#allocation3 + $0x18] sm:$0xff] %v188
      %205 = vst [vmem:[#allocation3 + $0x20] sm:$0xff] %v189
      %206 = vst [vmem:[#allocation3 + $0x28] sm:$0xff] %v190
      %207 = vst [vmem:[#allocation3 + $0x30] sm:$0xff] %v191
      %208 = vst [vmem:[#allocation3 + $0x38] sm:$0xff] %v192
      %209 = vst [vmem:[#allocation3 + $0x40] sm:$0xff] %v193
      %210 = vst [vmem:[#allocation3 + $0x48] sm:$0xff] %v194
      %211 = vst [vmem:[#allocation3 + $0x50] sm:$0xff] %v195
      %212 = vst [vmem:[#allocation3 + $0x58] sm:$0xff] %v196
      %213 = vst [vmem:[#allocation3 + $0x60] sm:$0xff] %v197
      %214 = vst [vmem:[#allocation3 + $0x68] sm:$0xff] %v198
      %215 = vst [vmem:[#allocation3 + $0x70] sm:$0xff] %v199
      %216 = vst [vmem:[#allocation3 + $0x78] sm:$0xff] %v200
      %v217 = vld [vmem:[%s2] sm:$0xff]
      %v218 = vld [vmem:[%s2 + $0x8] sm:$0xff]
      %v219 = vld [vmem:[%s2 + $0x10] sm:$0xff]
      %v220 = vld [vmem:[%s2 + $0x18] sm:$0xff]
      %v221 = vld [vmem:[%s2 + $0x20] sm:$0xff]
      %v222 = vld [vmem:[%s2 + $0x28] sm:$0xff]
      %v223 = vld [vmem:[%s2 + $0x30] sm:$0xff]
      %v224 = vld [vmem:[%s2 + $0x38] sm:$0xff]
      %v225 = vld [vmem:[%s2 + $0x40] sm:$0xff]
      %v226 = vld [vmem:[%s2 + $0x48] sm:$0xff]
      %v227 = vld [vmem:[%s2 + $0x50] sm:$0xff]
      %v228 = vld [vmem:[%s2 + $0x58] sm:$0xff]
      %v229 = vld [vmem:[%s2 + $0x60] sm:$0xff]
      %v230 = vld [vmem:[%s2 + $0x68] sm:$0xff]
      %v231 = vld [vmem:[%s2 + $0x70] sm:$0xff]
      %v232 = vld [vmem:[%s2 + $0x78] sm:$0xff]
      %v233 = vadd.f32 %v217, %v185
      %v234 = vadd.f32 %v218, %v186
      %v235 = vadd.f32 %v219, %v187
      %v236 = vadd.f32 %v220, %v188
      %v237 = vadd.f32 %v221, %v189
      %v238 = vadd.f32 %v222, %v190
      %v239 = vadd.f32 %v223, %v191
      %v240 = vadd.f32 %v224, %v192
      %v241 = vadd.f32 %v225, %v193
      %v242 = vadd.f32 %v226, %v194
      %v243 = vadd.f32 %v227, %v195
      %v244 = vadd.f32 %v228, %v196
      %v245 = vadd.f32 %v229, %v197
      %v246 = vadd.f32 %v230, %v198
      %v247 = vadd.f32 %v231, %v199
      %v248 = vadd.f32 %v232, %v200
      %v249 = vmul.f32 %v233, 0.33333334
      %v250 = vmul.f32 %v234, 0.33333334
      %v251 = vmul.f32 %v235, 0.33333334
      %v252 = vmul.f32 %v236, 0.33333334
      %v253 = vmul.f32 %v237, 0.33333334
      %v254 = vmul.f32 %v238, 0.33333334
      %v255 = vmul.f32 %v239, 0.33333334
      %v256 = vmul.f32 %v240, 0.33333334
      %v257 = vmul.f32 %v241, 0.33333334
      %v258 = vmul.f32 %v242, 0.33333334
      %v259 = vmul.f32 %v243, 0.33333334
      %v260 = vmul.f32 %v244, 0.33333334
      %v261 = vmul.f32 %v245, 0.33333334
      %v262 = vmul.f32 %v246, 0.33333334
      %v263 = vmul.f32 %v247, 0.33333334
      %v264 = vmul.f32 %v248, 0.33333334
      %265 = vst [vmem:[%s4] sm:$0xff] %v249
      %266 = vst [vmem:[%s4 + $0x8] sm:$0xff] %v250
      %267 = vst [vmem:[%s4 + $0x10] sm:$0xff] %v251
      %268 = vst [vmem:[%s4 + $0x18] sm:$0xff] %v252
      %269 = vst [vmem:[%s4 + $0x20] sm:$0xff] %v253
      %270 = vst [vmem:[%s4 + $0x28] sm:$0xff] %v254
      %271 = vst [vmem:[%s4 + $0x30] sm:$0xff] %v255
      %272 = vst [vmem:[%s4 + $0x38] sm:$0xff] %v256
      %273 = vst [vmem:[%s4 + $0x40] sm:$0xff] %v257
      %274 = vst [vmem:[%s4 + $0x48] sm:$0xff] %v258
      %275 = vst [vmem:[%s4 + $0x50] sm:$0xff] %v259
      %276 = vst [vmem:[%s4 + $0x58] sm:$0xff] %v260
      %277 = vst [vmem:[%s4 + $0x60] sm:$0xff] %v261
      %278 = vst [vmem:[%s4 + $0x68] sm:$0xff] %v262
      %279 = vst [vmem:[%s4 + $0x70] sm:$0xff] %v263
      %280 = vst [vmem:[%s4 + $0x78] sm:$0xff] %v264
    $region21: #{_lgncause_forward_impl.6} parent=1 // pred_fallthru
      _
    // Predicated region
    $region22: #{_lgncause_forward_impl.6} parent=1 // pred_check
      _
    $region23: #{_lgncause_forward_impl.6} parent=1 // pred_check_branch
      %282 = sbr.rel (0) target = $region25
    $region24: #{_lgncause_forward_impl.6} parent=1 // pred_region
      %284 = vsyncadd [#allocation4], 0
      %s285 = sshll.u32 [#allocation3], 4
      %s286 = int_to_ptr.vmem [resolvable:$true] %s285
      %s287 = sshll.u32 %s3, 4
      %s288 = int_to_ptr.hbm [resolvable:$true] %s287
      %293 = dma.vmem_to_hbm [thread:$0]  %s286, 2048, %s288, [#allocation4], 128, 128, 8
    $region25: #{_lgncause_forward_impl.6} parent=1 // pred_fallthru
      _
    // Predicated region
    $region26: #{_lgncause_forward_impl.6} parent=1 // pred_check
      _
    $region27: #{_lgncause_forward_impl.6} parent=1 // pred_check_branch
      %295 = sbr.rel (0) target = $region29
    $region28: #{_lgncause_forward_impl.6} parent=1 // pred_region
      _
    $region29: #{_lgncause_forward_impl.6} parent=1 // pred_fallthru
      _
    // Predicated region
    $region30: #{_lgncause_forward_impl.6} parent=1 // pred_check
      _
    $region31: #{_lgncause_forward_impl.6} parent=1 // pred_check_branch
      %297 = sbr.rel (0) target = $region33
    $region32: #{_lgncause_forward_impl.6} parent=1 // pred_region
      %299 = dma.done [#allocation4], 2048
    $region33: #{_lgncause_forward_impl.6} parent=1 // pred_fallthru
      _
    // Predicated region
    $region34: #{_lgncause_forward_impl.6} parent=1 // pred_check
      _
    $region35: #{_lgncause_forward_impl.6} parent=1 // pred_check_branch
      %301 = sbr.rel (0) target = $region37
    $region36: #{_lgncause_forward_impl.6} parent=1 // pred_region
      _
    $region37: #{_lgncause_forward_impl.6} parent=1 // pred_fallthru
      _
    %302 = vsyncpa [#allocation4], 1

// kernel: _lgncause_forward_impl.5
$region0: #{_lgncause_forward_impl.5}
  #allocation0 [shape = 'u32[]', space=smem, size = 0x4, offset = 0x4, fixed_abs, tag = 'smem constant byte address 0x4 - core index']
  #allocation1 [shape = 'u32[72,128]{1,0:T(1,128)}', space=vmem, size = 0x9000, scoped, tag = 'internal scratch']
  #allocation2 [shape = 'f32[128,128]{1,0:T(8,128)}', space=vmem, size = 0x10000, scoped, tag = 'scratch operand']
  %s0 = inlined_call_operand.vmem [shape: f32[128,128], index: 0, kind: input, shape index: {}]
  %s1 = inlined_call_operand.vmem [shape: f32[128,128], index: 1, kind: input, shape index: {}, may-alias: {1,2}]
  %s2 = inlined_call_operand.vmem [shape: f32[128,128], index: 2, kind: input, shape index: {}, may-alias: {1,2}]
  %s3 = inlined_call_operand.vmem [shape: f32[128,128], index: 3, kind: output, shape index: {0}]
  %s4 = inlined_call_operand.vmem [shape: f32[128,128], index: 4, kind: output, shape index: {1}]
  %5 = xla_tuple %s3, %s4
  %s6 = sld [smem:[#allocation0]]
  $region38: #{_lgncause_forward_impl.5} parent=0
    _
  %s8 = ssub.s32 1, %s6
  %s9 = scalar_select 0, %s8, %s6
  // Predicated region
  $region2: #{_lgncause_forward_impl.5} parent=0 // pred_check
    _
  $region3: #{_lgncause_forward_impl.5} parent=0 // pred_check_branch
    %11 = sbr.rel (0) target = $region5
  $region4: #{_lgncause_forward_impl.5} parent=0 // pred_region
    _
  $region5: #{_lgncause_forward_impl.5} parent=0 // pred_fallthru
    _
  // Predicated region
  $region6: #{_lgncause_forward_impl.5} parent=0 // pred_check
    _
  $region7: #{_lgncause_forward_impl.5} parent=0 // pred_check_branch
    %13 = sbr.rel (0) target = $region9
  $region8: #{_lgncause_forward_impl.5} parent=0 // pred_region
    _
  $region9: #{_lgncause_forward_impl.5} parent=0 // pred_fallthru
    _
  // Predicated region
  $region10: #{_lgncause_forward_impl.5} parent=0 // pred_check
    _
  $region11: #{_lgncause_forward_impl.5} parent=0 // pred_check_branch
    %15 = sbr.rel (0) target = $region13
  $region12: #{_lgncause_forward_impl.5} parent=0 // pred_region
    _
  $region13: #{_lgncause_forward_impl.5} parent=0 // pred_fallthru
    _
  %p16 = scmp.eq.s32.totalorder 0, 0
  // Predicated region
  $region14: #{_lgncause_forward_impl.5} parent=0 // pred_check
    %p17 = pneg %p16
  $region15: #{_lgncause_forward_impl.5} parent=0 // pred_check_branch
    %19 = sbr.rel (%p17) target = $region17
  $region16: #{_lgncause_forward_impl.5} parent=0 // pred_region
    %20 = vst [vmem:[#allocation2] sm:$0xff] 0.0
    %21 = vst [vmem:[#allocation2 + $0x8] sm:$0xff] 0.0
    %22 = vst [vmem:[#allocation2 + $0x10] sm:$0xff] 0.0
    %23 = vst [vmem:[#allocation2 + $0x18] sm:$0xff] 0.0
    %24 = vst [vmem:[#allocation2 + $0x20] sm:$0xff] 0.0
    %25 = vst [vmem:[#allocation2 + $0x28] sm:$0xff] 0.0
    %26 = vst [vmem:[#allocation2 + $0x30] sm:$0xff] 0.0
    %27 = vst [vmem:[#allocation2 + $0x38] sm:$0xff] 0.0
    %28 = vst [vmem:[#allocation2 + $0x40] sm:$0xff] 0.0
    %29 = vst [vmem:[#allocation2 + $0x48] sm:$0xff] 0.0
    %30 = vst [vmem:[#allocation2 + $0x50] sm:$0xff] 0.0
    %31 = vst [vmem:[#allocation2 + $0x58] sm:$0xff] 0.0
    %32 = vst [vmem:[#allocation2 + $0x60] sm:$0xff] 0.0
    %33 = vst [vmem:[#allocation2 + $0x68] sm:$0xff] 0.0
    %34 = vst [vmem:[#allocation2 + $0x70] sm:$0xff] 0.0
    %35 = vst [vmem:[#allocation2 + $0x78] sm:$0xff] 0.0
  $region17: #{_lgncause_forward_impl.5} parent=0 // pred_fallthru
    _
  %v36 = vld [vmem:[#allocation2] sm:$0xff]
  %v37 = vld [vmem:[#allocation2 + $0x8] sm:$0xff]
  %v38 = vld [vmem:[#allocation2 + $0x10] sm:$0xff]
  %v39 = vld [vmem:[#allocation2 + $0x18] sm:$0xff]
  %v40 = vld [vmem:[#allocation2 + $0x20] sm:$0xff]
  %v41 = vld [vmem:[#allocation2 + $0x28] sm:$0xff]
  %v42 = vld [vmem:[#allocation2 + $0x30] sm:$0xff]
  %v43 = vld [vmem:[#allocation2 + $0x38] sm:$0xff]
  %v44 = vld [vmem:[#allocation2 + $0x40] sm:$0xff]
  %v45 = vld [vmem:[#allocation2 + $0x48] sm:$0xff]
  %v46 = vld [vmem:[#allocation2 + $0x50] sm:$0xff]
  %v47 = vld [vmem:[#allocation2 + $0x58] sm:$0xff]
  %v48 = vld [vmem:[#allocation2 + $0x60] sm:$0xff]
  %v49 = vld [vmem:[#allocation2 + $0x68] sm:$0xff]
  %v50 = vld [vmem:[#allocation2 + $0x70] sm:$0xff]
  %v51 = vld [vmem:[#allocation2 + $0x78] sm:$0xff]
  %v52 = vld [vmem:[%s0] sm:$0xff]
  %v53 = vld [vmem:[%s0 + $0x8] sm:$0xff]
  %v54 = vld [vmem:[%s0 + $0x10] sm:$0xff]
  %v55 = vld [vmem:[%s0 + $0x18] sm:$0xff]
  %v56 = vld [vmem:[%s0 + $0x20] sm:$0xff]
  %v57 = vld [vmem:[%s0 + $0x28] sm:$0xff]
  %v58 = vld [vmem:[%s0 + $0x30] sm:$0xff]
  %v59 = vld [vmem:[%s0 + $0x38] sm:$0xff]
  %v60 = vld [vmem:[%s0 + $0x40] sm:$0xff]
  %v61 = vld [vmem:[%s0 + $0x48] sm:$0xff]
  %v62 = vld [vmem:[%s0 + $0x50] sm:$0xff]
  %v63 = vld [vmem:[%s0 + $0x58] sm:$0xff]
  %v64 = vld [vmem:[%s0 + $0x60] sm:$0xff]
  %v65 = vld [vmem:[%s0 + $0x68] sm:$0xff]
  %v66 = vld [vmem:[%s0 + $0x70] sm:$0xff]
  %v67 = vld [vmem:[%s0 + $0x78] sm:$0xff]
  %v68 = vld [vmem:[%s1] sm:$0xff]
  %v69 = vld [vmem:[%s1 + $0x8] sm:$0xff]
  %v70 = vld [vmem:[%s1 + $0x10] sm:$0xff]
  %v71 = vld [vmem:[%s1 + $0x18] sm:$0xff]
  %v72 = vld [vmem:[%s1 + $0x20] sm:$0xff]
  %v73 = vld [vmem:[%s1 + $0x28] sm:$0xff]
  %v74 = vld [vmem:[%s1 + $0x30] sm:$0xff]
  %v75 = vld [vmem:[%s1 + $0x38] sm:$0xff]
  %v76 = vld [vmem:[%s1 + $0x40] sm:$0xff]
  %v77 = vld [vmem:[%s1 + $0x48] sm:$0xff]
  %v78 = vld [vmem:[%s1 + $0x50] sm:$0xff]
  %v79 = vld [vmem:[%s1 + $0x58] sm:$0xff]
  %v80 = vld [vmem:[%s1 + $0x60] sm:$0xff]
  %v81 = vld [vmem:[%s1 + $0x68] sm:$0xff]
  %v82 = vld [vmem:[%s1 + $0x70] sm:$0xff]
  %v83 = vld [vmem:[%s1 + $0x78] sm:$0xff]
  %84 = vmatpush.msra.mxu0 %v83
  %85 = vmatpush.msra.mxu0 %v82
  %86 = vmatpush.msra.mxu0 %v81
  %87 = vmatpush.msra.mxu0 %v80
  %88 = vmatpush.msra.mxu0 %v79
  %89 = vmatpush.msra.mxu0 %v78
  %90 = vmatpush.msra.mxu0 %v77
  %91 = vmatpush.msra.mxu0 %v76
  %92 = vmatpush.msra.mxu0 %v75
  %93 = vmatpush.msra.mxu0 %v74
  %94 = vmatpush.msra.mxu0 %v73
  %95 = vmatpush.msra.mxu0 %v72
  %96 = vmatpush.msra.mxu0 %v71
  %97 = vmatpush.msra.mxu0 %v70
  %98 = vmatpush.msra.mxu0 %v69
  %99 = vmatpush.msra.mxu0 %v68
  %100 = vmatmul.f32.gmra.mxu0 %v52
  %v101 = vpop.f32.mrf.mxu0
  %v102 = vadd.f32 0.0, %v101
  %103 = vmatmul.f32.gmra.mxu0 %v53
  %v104 = vpop.f32.mrf.mxu0
  %v105 = vadd.f32 0.0, %v104
  %106 = vmatmul.f32.gmra.mxu0 %v54
  %v107 = vpop.f32.mrf.mxu0
  %v108 = vadd.f32 0.0, %v107
  %109 = vmatmul.f32.gmra.mxu0 %v55
  %v110 = vpop.f32.mrf.mxu0
  %v111 = vadd.f32 0.0, %v110
  %112 = vmatmul.f32.gmra.mxu0 %v56
  %v113 = vpop.f32.mrf.mxu0
  %v114 = vadd.f32 0.0, %v113
  %115 = vmatmul.f32.gmra.mxu0 %v57
  %v116 = vpop.f32.mrf.mxu0
  %v117 = vadd.f32 0.0, %v116
  %118 = vmatmul.f32.gmra.mxu0 %v58
  %v119 = vpop.f32.mrf.mxu0
  %v120 = vadd.f32 0.0, %v119
  %121 = vmatmul.f32.gmra.mxu0 %v59
  %v122 = vpop.f32.mrf.mxu0
  %v123 = vadd.f32 0.0, %v122
  %124 = vmatmul.f32.gmra.mxu0 %v60
  %v125 = vpop.f32.mrf.mxu0
  %v126 = vadd.f32 0.0, %v125
  %127 = vmatmul.f32.gmra.mxu0 %v61
  %v128 = vpop.f32.mrf.mxu0
  %v129 = vadd.f32 0.0, %v128
  %130 = vmatmul.f32.gmra.mxu0 %v62
  %v131 = vpop.f32.mrf.mxu0
  %v132 = vadd.f32 0.0, %v131
  %133 = vmatmul.f32.gmra.mxu0 %v63
  %v134 = vpop.f32.mrf.mxu0
  %v135 = vadd.f32 0.0, %v134
  %136 = vmatmul.f32.gmra.mxu0 %v64
  %v137 = vpop.f32.mrf.mxu0
  %v138 = vadd.f32 0.0, %v137
  %139 = vmatmul.f32.gmra.mxu0 %v65
  %v140 = vpop.f32.mrf.mxu0
  %v141 = vadd.f32 0.0, %v140
  %142 = vmatmul.f32.gmra.mxu0 %v66
  %v143 = vpop.f32.mrf.mxu0
  %v144 = vadd.f32 0.0, %v143
  %145 = vmatmul.f32.gmra.mxu0 %v67
  %v146 = vpop.f32.mrf.mxu0
  %v147 = vadd.f32 0.0, %v146
  %148 = vdwg.mxu0
  %v149 = vadd.f32 %v36, %v102
  %v150 = vadd.f32 %v37, %v105
  %v151 = vadd.f32 %v38, %v108
  %v152 = vadd.f32 %v39, %v111
  %v153 = vadd.f32 %v40, %v114
  %v154 = vadd.f32 %v41, %v117
  %v155 = vadd.f32 %v42, %v120
  %v156 = vadd.f32 %v43, %v123
  %v157 = vadd.f32 %v44, %v126
  %v158 = vadd.f32 %v45, %v129
  %v159 = vadd.f32 %v46, %v132
  %v160 = vadd.f32 %v47, %v135
  %v161 = vadd.f32 %v48, %v138
  %v162 = vadd.f32 %v49, %v141
  %v163 = vadd.f32 %v50, %v144
  %v164 = vadd.f32 %v51, %v147
  %165 = vst [vmem:[#allocation2] sm:$0xff] %v149
  %166 = vst [vmem:[#allocation2 + $0x8] sm:$0xff] %v150
  %167 = vst [vmem:[#allocation2 + $0x10] sm:$0xff] %v151
  %168 = vst [vmem:[#allocation2 + $0x18] sm:$0xff] %v152
  %169 = vst [vmem:[#allocation2 + $0x20] sm:$0xff] %v153
  %170 = vst [vmem:[#allocation2 + $0x28] sm:$0xff] %v154
  %171 = vst [vmem:[#allocation2 + $0x30] sm:$0xff] %v155
  %172 = vst [vmem:[#allocation2 + $0x38] sm:$0xff] %v156
  %173 = vst [vmem:[#allocation2 + $0x40] sm:$0xff] %v157
  %174 = vst [vmem:[#allocation2 + $0x48] sm:$0xff] %v158
  %175 = vst [vmem:[#allocation2 + $0x50] sm:$0xff] %v159
  %176 = vst [vmem:[#allocation2 + $0x58] sm:$0xff] %v160
  %177 = vst [vmem:[#allocation2 + $0x60] sm:$0xff] %v161
  %178 = vst [vmem:[#allocation2 + $0x68] sm:$0xff] %v162
  %179 = vst [vmem:[#allocation2 + $0x70] sm:$0xff] %v163
  %180 = vst [vmem:[#allocation2 + $0x78] sm:$0xff] %v164
  // Predicated region
  $region18: #{_lgncause_forward_impl.5} parent=0 // pred_check
    %p181 = pneg %p16
  $region19: #{_lgncause_forward_impl.5} parent=0 // pred_check_branch
    %183 = sbr.rel (%p181) target = $region21
  $region20: #{_lgncause_forward_impl.5} parent=0 // pred_region
    %v184 = vld [vmem:[#allocation2] sm:$0xff]
    %v185 = vld [vmem:[#allocation2 + $0x8] sm:$0xff]
    %v186 = vld [vmem:[#allocation2 + $0x10] sm:$0xff]
    %v187 = vld [vmem:[#allocation2 + $0x18] sm:$0xff]
    %v188 = vld [vmem:[#allocation2 + $0x20] sm:$0xff]
    %v189 = vld [vmem:[#allocation2 + $0x28] sm:$0xff]
    %v190 = vld [vmem:[#allocation2 + $0x30] sm:$0xff]
    %v191 = vld [vmem:[#allocation2 + $0x38] sm:$0xff]
    %v192 = vld [vmem:[#allocation2 + $0x40] sm:$0xff]
    %v193 = vld [vmem:[#allocation2 + $0x48] sm:$0xff]
    %v194 = vld [vmem:[#allocation2 + $0x50] sm:$0xff]
    %v195 = vld [vmem:[#allocation2 + $0x58] sm:$0xff]
    %v196 = vld [vmem:[#allocation2 + $0x60] sm:$0xff]
    %v197 = vld [vmem:[#allocation2 + $0x68] sm:$0xff]
    %v198 = vld [vmem:[#allocation2 + $0x70] sm:$0xff]
    %v199 = vld [vmem:[#allocation2 + $0x78] sm:$0xff]
    %200 = vst [vmem:[%s3] sm:$0xff] %v184
    %201 = vst [vmem:[%s3 + $0x8] sm:$0xff] %v185
    %202 = vst [vmem:[%s3 + $0x10] sm:$0xff] %v186
    %203 = vst [vmem:[%s3 + $0x18] sm:$0xff] %v187
    %204 = vst [vmem:[%s3 + $0x20] sm:$0xff] %v188
    %205 = vst [vmem:[%s3 + $0x28] sm:$0xff] %v189
    %206 = vst [vmem:[%s3 + $0x30] sm:$0xff] %v190
    %207 = vst [vmem:[%s3 + $0x38] sm:$0xff] %v191
    %208 = vst [vmem:[%s3 + $0x40] sm:$0xff] %v192
    %209 = vst [vmem:[%s3 + $0x48] sm:$0xff] %v193
    %210 = vst [vmem:[%s3 + $0x50] sm:$0xff] %v194
    %211 = vst [vmem:[%s3 + $0x58] sm:$0xff] %v195
    %212 = vst [vmem:[%s3 + $0x60] sm:$0xff] %v196
    %213 = vst [vmem:[%s3 + $0x68] sm:$0xff] %v197
    %214 = vst [vmem:[%s3 + $0x70] sm:$0xff] %v198
    %215 = vst [vmem:[%s3 + $0x78] sm:$0xff] %v199
    %v216 = vld [vmem:[%s2] sm:$0xff]
    %v217 = vld [vmem:[%s2 + $0x8] sm:$0xff]
    %v218 = vld [vmem:[%s2 + $0x10] sm:$0xff]
    %v219 = vld [vmem:[%s2 + $0x18] sm:$0xff]
    %v220 = vld [vmem:[%s2 + $0x20] sm:$0xff]
    %v221 = vld [vmem:[%s2 + $0x28] sm:$0xff]
    %v222 = vld [vmem:[%s2 + $0x30] sm:$0xff]
    %v223 = vld [vmem:[%s2 + $0x38] sm:$0xff]
    %v224 = vld [vmem:[%s2 + $0x40] sm:$0xff]
    %v225 = vld [vmem:[%s2 + $0x48] sm:$0xff]
    %v226 = vld [vmem:[%s2 + $0x50] sm:$0xff]
    %v227 = vld [vmem:[%s2 + $0x58] sm:$0xff]
    %v228 = vld [vmem:[%s2 + $0x60] sm:$0xff]
    %v229 = vld [vmem:[%s2 + $0x68] sm:$0xff]
    %v230 = vld [vmem:[%s2 + $0x70] sm:$0xff]
    %v231 = vld [vmem:[%s2 + $0x78] sm:$0xff]
    %v232 = vadd.f32 %v216, %v184
    %v233 = vadd.f32 %v217, %v185
    %v234 = vadd.f32 %v218, %v186
    %v235 = vadd.f32 %v219, %v187
    %v236 = vadd.f32 %v220, %v188
    %v237 = vadd.f32 %v221, %v189
    %v238 = vadd.f32 %v222, %v190
    %v239 = vadd.f32 %v223, %v191
    %v240 = vadd.f32 %v224, %v192
    %v241 = vadd.f32 %v225, %v193
    %v242 = vadd.f32 %v226, %v194
    %v243 = vadd.f32 %v227, %v195
    %v244 = vadd.f32 %v228, %v196
    %v245 = vadd.f32 %v229, %v197
    %v246 = vadd.f32 %v230, %v198
    %v247 = vadd.f32 %v231, %v199
    %248 = vst [vmem:[%s4] sm:$0xff] %v232
    %249 = vst [vmem:[%s4 + $0x8] sm:$0xff] %v233
    %250 = vst [vmem:[%s4 + $0x10] sm:$0xff] %v234
    %251 = vst [vmem:[%s4 + $0x18] sm:$0xff] %v235
    %252 = vst [vmem:[%s4 + $0x20] sm:$0xff] %v236
    %253 = vst [vmem:[%s4 + $0x28] sm:$0xff] %v237
    %254 = vst [vmem:[%s4 + $0x30] sm:$0xff] %v238
    %255 = vst [vmem:[%s4 + $0x38] sm:$0xff] %v239
    %256 = vst [vmem:[%s4 + $0x40] sm:$0xff] %v240
    %257 = vst [vmem:[%s4 + $0x48] sm:$0xff] %v241
    %258 = vst [vmem:[%s4 + $0x50] sm:$0xff] %v242
    %259 = vst [vmem:[%s4 + $0x58] sm:$0xff] %v243
    %260 = vst [vmem:[%s4 + $0x60] sm:$0xff] %v244
    %261 = vst [vmem:[%s4 + $0x68] sm:$0xff] %v245
    %262 = vst [vmem:[%s4 + $0x70] sm:$0xff] %v246
    %263 = vst [vmem:[%s4 + $0x78] sm:$0xff] %v247
  $region21: #{_lgncause_forward_impl.5} parent=0 // pred_fallthru
    _
  // Predicated region
  $region22: #{_lgncause_forward_impl.5} parent=0 // pred_check
    _
  $region23: #{_lgncause_forward_impl.5} parent=0 // pred_check_branch
    %265 = sbr.rel (0) target = $region25
  $region24: #{_lgncause_forward_impl.5} parent=0 // pred_region
    _
  $region25: #{_lgncause_forward_impl.5} parent=0 // pred_fallthru
    _
  // Predicated region
  $region26: #{_lgncause_forward_impl.5} parent=0 // pred_check
    _
  $region27: #{_lgncause_forward_impl.5} parent=0 // pred_check_branch
    %267 = sbr.rel (0) target = $region29
  $region28: #{_lgncause_forward_impl.5} parent=0 // pred_region
    _
  $region29: #{_lgncause_forward_impl.5} parent=0 // pred_fallthru
    _
  // Predicated region
  $region30: #{_lgncause_forward_impl.5} parent=0 // pred_check
    _
  $region31: #{_lgncause_forward_impl.5} parent=0 // pred_check_branch
    %269 = sbr.rel (0) target = $region33
  $region32: #{_lgncause_forward_impl.5} parent=0 // pred_region
    _
  $region33: #{_lgncause_forward_impl.5} parent=0 // pred_fallthru
    _
  // Predicated region
  $region34: #{_lgncause_forward_impl.5} parent=0 // pred_check
    _
  $region35: #{_lgncause_forward_impl.5} parent=0 // pred_check_branch
    %271 = sbr.rel (0) target = $region37
  $region36: #{_lgncause_forward_impl.5} parent=0 // pred_region
    _
  $region37: #{_lgncause_forward_impl.5} parent=0 // pred_fallthru
    _

// kernel: _lgncause_forward_impl.9
$region0: #{_lgncause_forward_impl.9}
  #allocation0 [shape = 'u32[]', space=smem, size = 0x4, offset = 0x4, fixed_abs, tag = 'smem constant byte address 0x4 - core index']
  #allocation1 [shape = 'u32[72,128]{1,0:T(1,128)}', space=vmem, size = 0x9000, scoped, tag = 'internal scratch']
  #allocation2 [shape = 'f32[6]{0:T(128)}', space=smem, size = 0x200, scoped, tag = 'scratch operand']
  %s0 = inlined_call_operand.vmem [shape: f32[64,128], index: 0, kind: input, shape index: {}]
  %s1 = inlined_call_operand.vmem [shape: f32[64,128], index: 1, kind: input, shape index: {}]
  %s2 = inlined_call_operand.vmem [shape: f32[64,128], index: 2, kind: input, shape index: {}]
  %s3 = inlined_call_operand.vmem [shape: f32[64,128], index: 3, kind: input, shape index: {}]
  %s4 = inlined_call_operand.vmem [shape: f32[64,1], index: 4, kind: input, shape index: {}]
  %s5 = inlined_call_operand.vmem [shape: f32[64,1], index: 5, kind: input, shape index: {}]
  %s6 = inlined_call_operand.vmem [shape: f32[64,1], index: 6, kind: input, shape index: {}]
  %s7 = inlined_call_operand.vmem [shape: f32[6], index: 7, kind: output, shape index: {}]
  %s8 = sld [smem:[#allocation0]]
  $region46: #{_lgncause_forward_impl.9} parent=0
    _
  %s10 = ssub.s32 1, %s8
  %s11 = scalar_select 0, %s10, %s8
  $region1: #{_lgncause_forward_impl.9} parent=0
    #allocation3 [shape = 'u8[512]{0}', space=smem, size = 0x200, scoped, tag = 'output window, operand 0, single buffered']
    #allocation4 [shape = 's32[1]{0}', space=sflag, size = 0x4, scoped, tag = 'scoped memory for _lgncause_forward_impl.9']
    %12 = vsyncpa [#allocation4], 0
    // Predicated region
    $region2: #{_lgncause_forward_impl.9} parent=1 // pred_check
      _
    $region3: #{_lgncause_forward_impl.9} parent=1 // pred_check_branch
      %14 = sbr.rel (0) target = $region5
    $region4: #{_lgncause_forward_impl.9} parent=1 // pred_region
      _
    $region5: #{_lgncause_forward_impl.9} parent=1 // pred_fallthru
      _
    // Predicated region
    $region6: #{_lgncause_forward_impl.9} parent=1 // pred_check
      _
    $region7: #{_lgncause_forward_impl.9} parent=1 // pred_check_branch
      %16 = sbr.rel (0) target = $region9
    $region8: #{_lgncause_forward_impl.9} parent=1 // pred_region
      _
    $region9: #{_lgncause_forward_impl.9} parent=1 // pred_fallthru
      _
    // Predicated region
    $region10: #{_lgncause_forward_impl.9} parent=1 // pred_check
      _
    $region11: #{_lgncause_forward_impl.9} parent=1 // pred_check_branch
      %18 = sbr.rel (0) target = $region13
    $region12: #{_lgncause_forward_impl.9} parent=1 // pred_region
      _
    $region13: #{_lgncause_forward_impl.9} parent=1 // pred_fallthru
      _
    // Predicated region
    $region14: #{_lgncause_forward_impl.9} parent=1 // pred_check
      _
    $region15: #{_lgncause_forward_impl.9} parent=1 // pred_check_branch
      %20 = sbr.rel (0) target = $region17
    $region16: #{_lgncause_forward_impl.9} parent=1 // pred_region
      _
    $region17: #{_lgncause_forward_impl.9} parent=1 // pred_fallthru
      _
    // Predicated region
    $region18: #{_lgncause_forward_impl.9} parent=1 // pred_check
      _
    $region19: #{_lgncause_forward_impl.9} parent=1 // pred_check_branch
      %22 = sbr.rel (0) target = $region21
    $region20: #{_lgncause_forward_impl.9} parent=1 // pred_region
      _
    $region21: #{_lgncause_forward_impl.9} parent=1 // pred_fallthru
      _
    // Predicated region
    $region22: #{_lgncause_forward_impl.9} parent=1 // pred_check
      _
    $region23: #{_lgncause_forward_impl.9} parent=1 // pred_check_branch
      %24 = sbr.rel (0) target = $region25
    $region24: #{_lgncause_forward_impl.9} parent=1 // pred_region
      _
    $region25: #{_lgncause_forward_impl.9} parent=1 // pred_fallthru
      _
    // Predicated region
    $region26: #{_lgncause_forward_impl.9} parent=1 // pred_check
      _
    $region27: #{_lgncause_forward_impl.9} parent=1 // pred_check_branch
      %26 = sbr.rel (0) target = $region29
    $region28: #{_lgncause_forward_impl.9} parent=1 // pred_region
      _
    $region29: #{_lgncause_forward_impl.9} parent=1 // pred_fallthru
      _
    %p27 = scmp.eq.s32.totalorder 0, 0
    // Predicated region
    $region30: #{_lgncause_forward_impl.9} parent=1 // pred_check
      %p28 = pneg %p27
    $region31: #{_lgncause_forward_impl.9} parent=1 // pred_check_branch
      %30 = sbr.rel (%p28) target = $region33
    $region32: #{_lgncause_forward_impl.9} parent=1 // pred_region
      %s31 = scalar_lea.smem [#allocation2], 0
      %32 = sst [smem:[%s31]] 0.0
      %s33 = scalar_lea.smem [#allocation2], 1
      %34 = sst [smem:[%s33]] 0.0
      %s35 = scalar_lea.smem [#allocation2], 2
      %36 = sst [smem:[%s35]] 0.0
      %s37 = scalar_lea.smem [#allocation2], 3
      %38 = sst [smem:[%s37]] 0.0
      %s39 = scalar_lea.smem [#allocation2], 4
      %40 = sst [smem:[%s39]] 0.0
      %s41 = scalar_lea.smem [#allocation2], 5
      %42 = sst [smem:[%s41]] 0.0
    $region33: #{_lgncause_forward_impl.9} parent=1 // pred_fallthru
      _
    %v43 = vld [vmem:[%s0] sm:$0xff]
    %v44 = vld [vmem:[%s0 + $0x8] sm:$0xff]
    %v45 = vld [vmem:[%s0 + $0x10] sm:$0xff]
    %v46 = vld [vmem:[%s0 + $0x18] sm:$0xff]
    %v47 = vld [vmem:[%s0 + $0x20] sm:$0xff]
    %v48 = vld [vmem:[%s0 + $0x28] sm:$0xff]
    %v49 = vld [vmem:[%s0 + $0x30] sm:$0xff]
    %v50 = vld [vmem:[%s0 + $0x38] sm:$0xff]
    %v51 = vld [vmem:[%s1] sm:$0xff]
    %v52 = vld [vmem:[%s1 + $0x8] sm:$0xff]
    %v53 = vld [vmem:[%s1 + $0x10] sm:$0xff]
    %v54 = vld [vmem:[%s1 + $0x18] sm:$0xff]
    %v55 = vld [vmem:[%s1 + $0x20] sm:$0xff]
    %v56 = vld [vmem:[%s1 + $0x28] sm:$0xff]
    %v57 = vld [vmem:[%s1 + $0x30] sm:$0xff]
    %v58 = vld [vmem:[%s1 + $0x38] sm:$0xff]
    %v59 = vld [vmem:[%s2] sm:$0xff]
    %v60 = vld [vmem:[%s2 + $0x8] sm:$0xff]
    %v61 = vld [vmem:[%s2 + $0x10] sm:$0xff]
    %v62 = vld [vmem:[%s2 + $0x18] sm:$0xff]
    %v63 = vld [vmem:[%s2 + $0x20] sm:$0xff]
    %v64 = vld [vmem:[%s2 + $0x28] sm:$0xff]
    %v65 = vld [vmem:[%s2 + $0x30] sm:$0xff]
    %v66 = vld [vmem:[%s2 + $0x38] sm:$0xff]
    %v67 = vld [vmem:[%s3] sm:$0xff]
    %v68 = vld [vmem:[%s3 + $0x8] sm:$0xff]
    %v69 = vld [vmem:[%s3 + $0x10] sm:$0xff]
    %v70 = vld [vmem:[%s3 + $0x18] sm:$0xff]
    %v71 = vld [vmem:[%s3 + $0x20] sm:$0xff]
    %v72 = vld [vmem:[%s3 + $0x28] sm:$0xff]
    %v73 = vld [vmem:[%s3 + $0x30] sm:$0xff]
    %v74 = vld [vmem:[%s3 + $0x38] sm:$0xff]
    %v75 = vld [vmem:[%s4] sm:$0xff]
    %v76 = vld [vmem:[%s4 + $0x8] sm:$0xff]
    %v77 = vld [vmem:[%s4 + $0x10] sm:$0xff]
    %v78 = vld [vmem:[%s4 + $0x18] sm:$0xff]
    %v79 = vld [vmem:[%s4 + $0x20] sm:$0xff]
    %v80 = vld [vmem:[%s4 + $0x28] sm:$0xff]
    %v81 = vld [vmem:[%s4 + $0x30] sm:$0xff]
    %v82 = vld [vmem:[%s4 + $0x38] sm:$0xff]
    %v83 = vld [vmem:[%s5] sm:$0xff]
    %v84 = vld [vmem:[%s5 + $0x8] sm:$0xff]
    %v85 = vld [vmem:[%s5 + $0x10] sm:$0xff]
    %v86 = vld [vmem:[%s5 + $0x18] sm:$0xff]
    %v87 = vld [vmem:[%s5 + $0x20] sm:$0xff]
    %v88 = vld [vmem:[%s5 + $0x28] sm:$0xff]
    %v89 = vld [vmem:[%s5 + $0x30] sm:$0xff]
    %v90 = vld [vmem:[%s5 + $0x38] sm:$0xff]
    %v91 = vld [vmem:[%s6] sm:$0xff]
    %v92 = vld [vmem:[%s6 + $0x8] sm:$0xff]
    %v93 = vld [vmem:[%s6 + $0x10] sm:$0xff]
    %v94 = vld [vmem:[%s6 + $0x18] sm:$0xff]
    %v95 = vld [vmem:[%s6 + $0x20] sm:$0xff]
    %v96 = vld [vmem:[%s6 + $0x28] sm:$0xff]
    %v97 = vld [vmem:[%s6 + $0x30] sm:$0xff]
    %v98 = vld [vmem:[%s6 + $0x38] sm:$0xff]
    %v99 = vmul.f32 %v43, %v51
    %v100 = vmul.f32 %v44, %v52
    %v101 = vmul.f32 %v45, %v53
    %v102 = vmul.f32 %v46, %v54
    %v103 = vmul.f32 %v47, %v55
    %v104 = vmul.f32 %v48, %v56
    %v105 = vmul.f32 %v49, %v57
    %v106 = vmul.f32 %v50, %v58
    %107 = vadd.xlane.f32.xlu0 %v99
    %v108 = vpop.xlane.xlu0 %107
    %109 = vadd.xlane.f32.xlu0 %v100
    %v110 = vpop.xlane.xlu0 %109
    %111 = vadd.xlane.f32.xlu0 %v101
    %v112 = vpop.xlane.xlu0 %111
    %113 = vadd.xlane.f32.xlu0 %v102
    %v114 = vpop.xlane.xlu0 %113
    %115 = vadd.xlane.f32.xlu0 %v103
    %v116 = vpop.xlane.xlu0 %115
    %117 = vadd.xlane.f32.xlu0 %v104
    %v118 = vpop.xlane.xlu0 %117
    %119 = vadd.xlane.f32.xlu0 %v105
    %v120 = vpop.xlane.xlu0 %119
    %121 = vadd.xlane.f32.xlu0 %v106
    %v122 = vpop.xlane.xlu0 %121
    %v123 = vmul.f32 %v59, %v67
    %v124 = vmul.f32 %v60, %v68
    %v125 = vmul.f32 %v61, %v69
    %v126 = vmul.f32 %v62, %v70
    %v127 = vmul.f32 %v63, %v71
    %v128 = vmul.f32 %v64, %v72
    %v129 = vmul.f32 %v65, %v73
    %v130 = vmul.f32 %v66, %v74
    %131 = vadd.xlane.f32.xlu0 %v123
    %v132 = vpop.xlane.xlu0 %131
    %133 = vadd.xlane.f32.xlu0 %v124
    %v134 = vpop.xlane.xlu0 %133
    %135 = vadd.xlane.f32.xlu0 %v125
    %v136 = vpop.xlane.xlu0 %135
    %137 = vadd.xlane.f32.xlu0 %v126
    %v138 = vpop.xlane.xlu0 %137
    %139 = vadd.xlane.f32.xlu0 %v127
    %v140 = vpop.xlane.xlu0 %139
    %141 = vadd.xlane.f32.xlu0 %v128
    %v142 = vpop.xlane.xlu0 %141
    %143 = vadd.xlane.f32.xlu0 %v129
    %v144 = vpop.xlane.xlu0 %143
    %145 = vadd.xlane.f32.xlu0 %v130
    %v146 = vpop.xlane.xlu0 %145
    %v147 = vmax.f32 %v108, 0.0
    %v148 = vmax.f32 %v110, 0.0
    %v149 = vmax.f32 %v112, 0.0
    %v150 = vmax.f32 %v114, 0.0
    %v151 = vmax.f32 %v116, 0.0
    %v152 = vmax.f32 %v118, 0.0
    %v153 = vmax.f32 %v120, 0.0
    %v154 = vmax.f32 %v122, 0.0
    %v155 = vmul.f32 %v108, %v75
    %v156 = vmul.f32 %v110, %v76
    %v157 = vmul.f32 %v112, %v77
    %v158 = vmul.f32 %v114, %v78
    %v159 = vmul.f32 %v116, %v79
    %v160 = vmul.f32 %v118, %v80
    %v161 = vmul.f32 %v120, %v81
    %v162 = vmul.f32 %v122, %v82
    %v163 = vsub.f32 %v147, %v155
    %v164 = vsub.f32 %v148, %v156
    %v165 = vsub.f32 %v149, %v157
    %v166 = vsub.f32 %v150, %v158
    %v167 = vsub.f32 %v151, %v159
    %v168 = vsub.f32 %v152, %v160
    %v169 = vsub.f32 %v153, %v161
    %v170 = vsub.f32 %v154, %v162
    %v171 = vand.u32 2147483647, %v108
    %v172 = vand.u32 2147483647, %v110
    %v173 = vand.u32 2147483647, %v112
    %v174 = vand.u32 2147483647, %v114
    %v175 = vand.u32 2147483647, %v116
    %v176 = vand.u32 2147483647, %v118
    %v177 = vand.u32 2147483647, %v120
    %v178 = vand.u32 2147483647, %v122
    %v179 = vsub.f32 0.0, %v171
    %v180 = vsub.f32 0.0, %v172
    %v181 = vsub.f32 0.0, %v173
    %v182 = vsub.f32 0.0, %v174
    %v183 = vsub.f32 0.0, %v175
    %v184 = vsub.f32 0.0, %v176
    %v185 = vsub.f32 0.0, %v177
    %v186 = vsub.f32 0.0, %v178
    %v187 = vmul.f32 %v179, 1.442695
    %v188 = vpow.pop %v187
    %v189 = vmul.f32 %v180, 1.442695
    %v190 = vpow.pop %v189
    %v191 = vmul.f32 %v181, 1.442695
    %v192 = vpow.pop %v191
    %v193 = vmul.f32 %v182, 1.442695
    %v194 = vpow.pop %v193
    %v195 = vmul.f32 %v183, 1.442695
    %v196 = vpow.pop %v195
    %v197 = vmul.f32 %v184, 1.442695
    %v198 = vpow.pop %v197
    %v199 = vmul.f32 %v185, 1.442695
    %v200 = vpow.pop %v199
    %v201 = vmul.f32 %v186, 1.442695
    %v202 = vpow.pop %v201
    %v203 = vadd.f32 %v188, 1.0
    %v204 = vlog2.pop %v203
    %v205 = vmul.f32 %v204, 0.6931472
    %v206 = vmul.f32 -0.5, %v188
    %v207 = vadd.f32 %v206, 1.0
    %v208 = vmul.f32 %v207, %v188
    %v209 = vand.u32 2147483647, %v188
    %vm210 = vcmp.lt.f32.partialorder %v209, 0.0004427343
    %v211 = vsel %vm210, %v208, %v205
    %v212 = vadd.f32 %v190, 1.0
    %v213 = vlog2.pop %v212
    %v214 = vmul.f32 %v213, 0.6931472
    %v215 = vmul.f32 -0.5, %v190
    %v216 = vadd.f32 %v215, 1.0
    %v217 = vmul.f32 %v216, %v190
    %v218 = vand.u32 2147483647, %v190
    %vm219 = vcmp.lt.f32.partialorder %v218, 0.0004427343
    %v220 = vsel %vm219, %v217, %v214
    %v221 = vadd.f32 %v192, 1.0
    %v222 = vlog2.pop %v221
    %v223 = vmul.f32 %v222, 0.6931472
    %v224 = vmul.f32 -0.5, %v192
    %v225 = vadd.f32 %v224, 1.0
    %v226 = vmul.f32 %v225, %v192
    %v227 = vand.u32 2147483647, %v192
    %vm228 = vcmp.lt.f32.partialorder %v227, 0.0004427343
    %v229 = vsel %vm228, %v226, %v223
    %v230 = vadd.f32 %v194, 1.0
    %v231 = vlog2.pop %v230
    %v232 = vmul.f32 %v231, 0.6931472
    %v233 = vmul.f32 -0.5, %v194
    %v234 = vadd.f32 %v233, 1.0
    %v235 = vmul.f32 %v234, %v194
    %v236 = vand.u32 2147483647, %v194
    %vm237 = vcmp.lt.f32.partialorder %v236, 0.0004427343
    %v238 = vsel %vm237, %v235, %v232
    %v239 = vadd.f32 %v196, 1.0
    %v240 = vlog2.pop %v239
    %v241 = vmul.f32 %v240, 0.6931472
    %v242 = vmul.f32 -0.5, %v196
    %v243 = vadd.f32 %v242, 1.0
    %v244 = vmul.f32 %v243, %v196
    %v245 = vand.u32 2147483647, %v196
    %vm246 = vcmp.lt.f32.partialorder %v245, 0.0004427343
    %v247 = vsel %vm246, %v244, %v241
    %v248 = vadd.f32 %v198, 1.0
    %v249 = vlog2.pop %v248
    %v250 = vmul.f32 %v249, 0.6931472
    %v251 = vmul.f32 -0.5, %v198
    %v252 = vadd.f32 %v251, 1.0
    %v253 = vmul.f32 %v252, %v198
    %v254 = vand.u32 2147483647, %v198
    %vm255 = vcmp.lt.f32.partialorder %v254, 0.0004427343
    %v256 = vsel %vm255, %v253, %v250
    %v257 = vadd.f32 %v200, 1.0
    %v258 = vlog2.pop %v257
    %v259 = vmul.f32 %v258, 0.6931472
    %v260 = vmul.f32 -0.5, %v200
    %v261 = vadd.f32 %v260, 1.0
    %v262 = vmul.f32 %v261, %v200
    %v263 = vand.u32 2147483647, %v200
    %vm264 = vcmp.lt.f32.partialorder %v263, 0.0004427343
    %v265 = vsel %vm264, %v262, %v259
    %v266 = vadd.f32 %v202, 1.0
    %v267 = vlog2.pop %v266
    %v268 = vmul.f32 %v267, 0.6931472
    %v269 = vmul.f32 -0.5, %v202
    %v270 = vadd.f32 %v269, 1.0
    %v271 = vmul.f32 %v270, %v202
    %v272 = vand.u32 2147483647, %v202
    %vm273 = vcmp.lt.f32.partialorder %v272, 0.0004427343
    %v274 = vsel %vm273, %v271, %v268
    %v275 = vadd.f32 %v163, %v211
    %v276 = vadd.f32 %v164, %v220
    %v277 = vadd.f32 %v165, %v229
    %v278 = vadd.f32 %v166, %v238
    %v279 = vadd.f32 %v167, %v247
    %v280 = vadd.f32 %v168, %v256
    %v281 = vadd.f32 %v169, %v265
    %v282 = vadd.f32 %v170, %v274
    %v283 = vsub.f32 0.0, %v108
    %v284 = vsub.f32 0.0, %v110
    %v285 = vsub.f32 0.0, %v112
    %v286 = vsub.f32 0.0, %v114
    %v287 = vsub.f32 0.0, %v116
    %v288 = vsub.f32 0.0, %v118
    %v289 = vsub.f32 0.0, %v120
    %v290 = vsub.f32 0.0, %v122
    %v291 = vmul.f32 %v283, 1.442695
    %v292 = vpow.pop %v291
    %v293 = vmul.f32 %v284, 1.442695
    %v294 = vpow.pop %v293
    %v295 = vmul.f32 %v285, 1.442695
    %v296 = vpow.pop %v295
    %v297 = vmul.f32 %v286, 1.442695
    %v298 = vpow.pop %v297
    %v299 = vmul.f32 %v287, 1.442695
    %v300 = vpow.pop %v299
    %v301 = vmul.f32 %v288, 1.442695
    %v302 = vpow.pop %v301
    %v303 = vmul.f32 %v289, 1.442695
    %v304 = vpow.pop %v303
    %v305 = vmul.f32 %v290, 1.442695
    %v306 = vpow.pop %v305
    %v307 = vadd.f32 %v292, 1.0
    %v308 = vadd.f32 %v294, 1.0
    %v309 = vadd.f32 %v296, 1.0
    %v310 = vadd.f32 %v298, 1.0
    %v311 = vadd.f32 %v300, 1.0
    %v312 = vadd.f32 %v302, 1.0
    %v313 = vadd.f32 %v304, 1.0
    %v314 = vadd.f32 %v306, 1.0
    %v315 = vrcp.pop %v307
    %v316 = vrcp.pop %v308
    %v317 = vrcp.pop %v309
    %v318 = vrcp.pop %v310
    %v319 = vrcp.pop %v311
    %v320 = vrcp.pop %v312
    %v321 = vrcp.pop %v313
    %v322 = vrcp.pop %v314
    %v323 = vmul.f32 %v83, %v275
    %v324 = vmul.f32 %v84, %v276
    %v325 = vmul.f32 %v85, %v277
    %v326 = vmul.f32 %v86, %v278
    %v327 = vmul.f32 %v87, %v279
    %v328 = vmul.f32 %v88, %v280
    %v329 = vmul.f32 %v89, %v281
    %v330 = vmul.f32 %v90, %v282
    %vm331 = vcmask 7168
    %v332 = vsel %vm331, %v323, 0.0
    %v333 = vsel %vm331, %v324, 0.0
    %v334 = vadd.f32 %v332, %v333
    %v335 = vsel %vm331, %v325, 0.0
    %v336 = vadd.f32 %v334, %v335
    %v337 = vsel %vm331, %v326, 0.0
    %v338 = vadd.f32 %v336, %v337
    %v339 = vsel %vm331, %v327, 0.0
    %v340 = vadd.f32 %v338, %v339
    %v341 = vsel %vm331, %v328, 0.0
    %v342 = vadd.f32 %v340, %v341
    %v343 = vsel %vm331, %v329, 0.0
    %v344 = vadd.f32 %v342, %v343
    %v345 = vsel %vm331, %v330, 0.0
    %v346 = vadd.f32 %v344, %v345
    %347 = vadd.xlane.f32.xlu0 %v346
    %v348 = vpop.xlane.xlu0 %347
    %v349 = vrot.slane %v348, 4
    %v350 = vadd.f32 %v348, %v349
    %v351 = vrot.slane %v350, 2
    %v352 = vadd.f32 %v350, %v351
    %v353 = vrot.slane %v352, 1
    %v354 = vadd.f32 %v352, %v353
    %s355 = vtos %v354
    %v356 = vsub.f32 %v315, %v75
    %v357 = vsub.f32 %v316, %v76
    %v358 = vsub.f32 %v317, %v77
    %v359 = vsub.f32 %v318, %v78
    %v360 = vsub.f32 %v319, %v79
    %v361 = vsub.f32 %v320, %v80
    %v362 = vsub.f32 %v321, %v81
    %v363 = vsub.f32 %v322, %v82
    %v364 = vand.u32 2147483647, %v356
    %v365 = vand.u32 2147483647, %v357
    %v366 = vand.u32 2147483647, %v358
    %v367 = vand.u32 2147483647, %v359
    %v368 = vand.u32 2147483647, %v360
    %v369 = vand.u32 2147483647, %v361
    %v370 = vand.u32 2147483647, %v362
    %v371 = vand.u32 2147483647, %v363
    %v372 = vmul.f32 %v83, %v364
    %v373 = vmul.f32 %v84, %v365
    %v374 = vmul.f32 %v85, %v366
    %v375 = vmul.f32 %v86, %v367
    %v376 = vmul.f32 %v87, %v368
    %v377 = vmul.f32 %v88, %v369
    %v378 = vmul.f32 %v89, %v370
    %v379 = vmul.f32 %v90, %v371
    %v380 = vsel %vm331, %v372, 0.0
    %v381 = vsel %vm331, %v373, 0.0
    %v382 = vadd.f32 %v380, %v381
    %v383 = vsel %vm331, %v374, 0.0
    %v384 = vadd.f32 %v382, %v383
    %v385 = vsel %vm331, %v375, 0.0
    %v386 = vadd.f32 %v384, %v385
    %v387 = vsel %vm331, %v376, 0.0
    %v388 = vadd.f32 %v386, %v387
    %v389 = vsel %vm331, %v377, 0.0
    %v390 = vadd.f32 %v388, %v389
    %v391 = vsel %vm331, %v378, 0.0
    %v392 = vadd.f32 %v390, %v391
    %v393 = vsel %vm331, %v379, 0.0
    %v394 = vadd.f32 %v392, %v393
    %395 = vadd.xlane.f32.xlu0 %v394
    %v396 = vpop.xlane.xlu0 %395
    %v397 = vrot.slane %v396, 4
    %v398 = vadd.f32 %v396, %v397
    %v399 = vrot.slane %v398, 2
    %v400 = vadd.f32 %v398, %v399
    %v401 = vrot.slane %v400, 1
    %v402 = vadd.f32 %v400, %v401
    %s403 = vtos %v402
    %v404 = vmax.f32 %v132, 0.0
    %v405 = vmax.f32 %v134, 0.0
    %v406 = vmax.f32 %v136, 0.0
    %v407 = vmax.f32 %v138, 0.0
    %v408 = vmax.f32 %v140, 0.0
    %v409 = vmax.f32 %v142, 0.0
    %v410 = vmax.f32 %v144, 0.0
    %v411 = vmax.f32 %v146, 0.0
    %v412 = vmul.f32 %v132, %v75
    %v413 = vmul.f32 %v134, %v76
    %v414 = vmul.f32 %v136, %v77
    %v415 = vmul.f32 %v138, %v78
    %v416 = vmul.f32 %v140, %v79
    %v417 = vmul.f32 %v142, %v80
    %v418 = vmul.f32 %v144, %v81
    %v419 = vmul.f32 %v146, %v82
    %v420 = vsub.f32 %v404, %v412
    %v421 = vsub.f32 %v405, %v413
    %v422 = vsub.f32 %v406, %v414
    %v423 = vsub.f32 %v407, %v415
    %v424 = vsub.f32 %v408, %v416
    %v425 = vsub.f32 %v409, %v417
    %v426 = vsub.f32 %v410, %v418
    %v427 = vsub.f32 %v411, %v419
    %v428 = vand.u32 2147483647, %v132
    %v429 = vand.u32 2147483647, %v134
    %v430 = vand.u32 2147483647, %v136
    %v431 = vand.u32 2147483647, %v138
    %v432 = vand.u32 2147483647, %v140
    %v433 = vand.u32 2147483647, %v142
    %v434 = vand.u32 2147483647, %v144
    %v435 = vand.u32 2147483647, %v146
    %v436 = vsub.f32 0.0, %v428
    %v437 = vsub.f32 0.0, %v429
    %v438 = vsub.f32 0.0, %v430
    %v439 = vsub.f32 0.0, %v431
    %v440 = vsub.f32 0.0, %v432
    %v441 = vsub.f32 0.0, %v433
    %v442 = vsub.f32 0.0, %v434
    %v443 = vsub.f32 0.0, %v435
    %v444 = vmul.f32 %v436, 1.442695
    %v445 = vpow.pop %v444
    %v446 = vmul.f32 %v437, 1.442695
    %v447 = vpow.pop %v446
    %v448 = vmul.f32 %v438, 1.442695
    %v449 = vpow.pop %v448
    %v450 = vmul.f32 %v439, 1.442695
    %v451 = vpow.pop %v450
    %v452 = vmul.f32 %v440, 1.442695
    %v453 = vpow.pop %v452
    %v454 = vmul.f32 %v441, 1.442695
    %v455 = vpow.pop %v454
    %v456 = vmul.f32 %v442, 1.442695
    %v457 = vpow.pop %v456
    %v458 = vmul.f32 %v443, 1.442695
    %v459 = vpow.pop %v458
    %v460 = vadd.f32 %v445, 1.0
    %v461 = vlog2.pop %v460
    %v462 = vmul.f32 %v461, 0.6931472
    %v463 = vmul.f32 -0.5, %v445
    %v464 = vadd.f32 %v463, 1.0
    %v465 = vmul.f32 %v464, %v445
    %v466 = vand.u32 2147483647, %v445
    %vm467 = vcmp.lt.f32.partialorder %v466, 0.0004427343
    %v468 = vsel %vm467, %v465, %v462
    %v469 = vadd.f32 %v447, 1.0
    %v470 = vlog2.pop %v469
    %v471 = vmul.f32 %v470, 0.6931472
    %v472 = vmul.f32 -0.5, %v447
    %v473 = vadd.f32 %v472, 1.0
    %v474 = vmul.f32 %v473, %v447
    %v475 = vand.u32 2147483647, %v447
    %vm476 = vcmp.lt.f32.partialorder %v475, 0.0004427343
    %v477 = vsel %vm476, %v474, %v471
    %v478 = vadd.f32 %v449, 1.0
    %v479 = vlog2.pop %v478
    %v480 = vmul.f32 %v479, 0.6931472
    %v481 = vmul.f32 -0.5, %v449
    %v482 = vadd.f32 %v481, 1.0
    %v483 = vmul.f32 %v482, %v449
    %v484 = vand.u32 2147483647, %v449
    %vm485 = vcmp.lt.f32.partialorder %v484, 0.0004427343
    %v486 = vsel %vm485, %v483, %v480
    %v487 = vadd.f32 %v451, 1.0
    %v488 = vlog2.pop %v487
    %v489 = vmul.f32 %v488, 0.6931472
    %v490 = vmul.f32 -0.5, %v451
    %v491 = vadd.f32 %v490, 1.0
    %v492 = vmul.f32 %v491, %v451
    %v493 = vand.u32 2147483647, %v451
    %vm494 = vcmp.lt.f32.partialorder %v493, 0.0004427343
    %v495 = vsel %vm494, %v492, %v489
    %v496 = vadd.f32 %v453, 1.0
    %v497 = vlog2.pop %v496
    %v498 = vmul.f32 %v497, 0.6931472
    %v499 = vmul.f32 -0.5, %v453
    %v500 = vadd.f32 %v499, 1.0
    %v501 = vmul.f32 %v500, %v453
    %v502 = vand.u32 2147483647, %v453
    %vm503 = vcmp.lt.f32.partialorder %v502, 0.0004427343
    %v504 = vsel %vm503, %v501, %v498
    %v505 = vadd.f32 %v455, 1.0
    %v506 = vlog2.pop %v505
    %v507 = vmul.f32 %v506, 0.6931472
    %v508 = vmul.f32 -0.5, %v455
    %v509 = vadd.f32 %v508, 1.0
    %v510 = vmul.f32 %v509, %v455
    %v511 = vand.u32 2147483647, %v455
    %vm512 = vcmp.lt.f32.partialorder %v511, 0.0004427343
    %v513 = vsel %vm512, %v510, %v507
    %v514 = vadd.f32 %v457, 1.0
    %v515 = vlog2.pop %v514
    %v516 = vmul.f32 %v515, 0.6931472
    %v517 = vmul.f32 -0.5, %v457
    %v518 = vadd.f32 %v517, 1.0
    %v519 = vmul.f32 %v518, %v457
    %v520 = vand.u32 2147483647, %v457
    %vm521 = vcmp.lt.f32.partialorder %v520, 0.0004427343
    %v522 = vsel %vm521, %v519, %v516
    %v523 = vadd.f32 %v459, 1.0
    %v524 = vlog2.pop %v523
    %v525 = vmul.f32 %v524, 0.6931472
    %v526 = vmul.f32 -0.5, %v459
    %v527 = vadd.f32 %v526, 1.0
    %v528 = vmul.f32 %v527, %v459
    %v529 = vand.u32 2147483647, %v459
    %vm530 = vcmp.lt.f32.partialorder %v529, 0.0004427343
    %v531 = vsel %vm530, %v528, %v525
    %v532 = vadd.f32 %v420, %v468
    %v533 = vadd.f32 %v421, %v477
    %v534 = vadd.f32 %v422, %v486
    %v535 = vadd.f32 %v423, %v495
    %v536 = vadd.f32 %v424, %v504
    %v537 = vadd.f32 %v425, %v513
    %v538 = vadd.f32 %v426, %v522
    %v539 = vadd.f32 %v427, %v531
    %v540 = vsub.f32 0.0, %v132
    %v541 = vsub.f32 0.0, %v134
    %v542 = vsub.f32 0.0, %v136
    %v543 = vsub.f32 0.0, %v138
    %v544 = vsub.f32 0.0, %v140
    %v545 = vsub.f32 0.0, %v142
    %v546 = vsub.f32 0.0, %v144
    %v547 = vsub.f32 0.0, %v146
    %v548 = vmul.f32 %v540, 1.442695
    %v549 = vpow.pop %v548
    %v550 = vmul.f32 %v541, 1.442695
    %v551 = vpow.pop %v550
    %v552 = vmul.f32 %v542, 1.442695
    %v553 = vpow.pop %v552
    %v554 = vmul.f32 %v543, 1.442695
    %v555 = vpow.pop %v554
    %v556 = vmul.f32 %v544, 1.442695
    %v557 = vpow.pop %v556
    %v558 = vmul.f32 %v545, 1.442695
    %v559 = vpow.pop %v558
    %v560 = vmul.f32 %v546, 1.442695
    %v561 = vpow.pop %v560
    %v562 = vmul.f32 %v547, 1.442695
    %v563 = vpow.pop %v562
    %v564 = vadd.f32 %v549, 1.0
    %v565 = vadd.f32 %v551, 1.0
    %v566 = vadd.f32 %v553, 1.0
    %v567 = vadd.f32 %v555, 1.0
    %v568 = vadd.f32 %v557, 1.0
    %v569 = vadd.f32 %v559, 1.0
    %v570 = vadd.f32 %v561, 1.0
    %v571 = vadd.f32 %v563, 1.0
    %v572 = vrcp.pop %v564
    %v573 = vrcp.pop %v565
    %v574 = vrcp.pop %v566
    %v575 = vrcp.pop %v567
    %v576 = vrcp.pop %v568
    %v577 = vrcp.pop %v569
    %v578 = vrcp.pop %v570
    %v579 = vrcp.pop %v571
    %v580 = vmul.f32 %v91, %v532
    %v581 = vmul.f32 %v92, %v533
    %v582 = vmul.f32 %v93, %v534
    %v583 = vmul.f32 %v94, %v535
    %v584 = vmul.f32 %v95, %v536
    %v585 = vmul.f32 %v96, %v537
    %v586 = vmul.f32 %v97, %v538
    %v587 = vmul.f32 %v98, %v539
    %v588 = vsel %vm331, %v580, 0.0
    %v589 = vsel %vm331, %v581, 0.0
    %v590 = vadd.f32 %v588, %v589
    %v591 = vsel %vm331, %v582, 0.0
    %v592 = vadd.f32 %v590, %v591
    %v593 = vsel %vm331, %v583, 0.0
    %v594 = vadd.f32 %v592, %v593
    %v595 = vsel %vm331, %v584, 0.0
    %v596 = vadd.f32 %v594, %v595
    %v597 = vsel %vm331, %v585, 0.0
    %v598 = vadd.f32 %v596, %v597
    %v599 = vsel %vm331, %v586, 0.0
    %v600 = vadd.f32 %v598, %v599
    %v601 = vsel %vm331, %v587, 0.0
    %v602 = vadd.f32 %v600, %v601
    %603 = vadd.xlane.f32.xlu0 %v602
    %v604 = vpop.xlane.xlu0 %603
    %v605 = vrot.slane %v604, 4
    %v606 = vadd.f32 %v604, %v605
    %v607 = vrot.slane %v606, 2
    %v608 = vadd.f32 %v606, %v607
    %v609 = vrot.slane %v608, 1
    %v610 = vadd.f32 %v608, %v609
    %s611 = vtos %v610
    %v612 = vsub.f32 %v572, %v75
    %v613 = vsub.f32 %v573, %v76
    %v614 = vsub.f32 %v574, %v77
    %v615 = vsub.f32 %v575, %v78
    %v616 = vsub.f32 %v576, %v79
    %v617 = vsub.f32 %v577, %v80
    %v618 = vsub.f32 %v578, %v81
    %v619 = vsub.f32 %v579, %v82
    %v620 = vand.u32 2147483647, %v612
    %v621 = vand.u32 2147483647, %v613
    %v622 = vand.u32 2147483647, %v614
    %v623 = vand.u32 2147483647, %v615
    %v624 = vand.u32 2147483647, %v616
    %v625 = vand.u32 2147483647, %v617
    %v626 = vand.u32 2147483647, %v618
    %v627 = vand.u32 2147483647, %v619
    %v628 = vmul.f32 %v91, %v620
    %v629 = vmul.f32 %v92, %v621
    %v630 = vmul.f32 %v93, %v622
    %v631 = vmul.f32 %v94, %v623
    %v632 = vmul.f32 %v95, %v624
    %v633 = vmul.f32 %v96, %v625
    %v634 = vmul.f32 %v97, %v626
    %v635 = vmul.f32 %v98, %v627
    %v636 = vsel %vm331, %v628, 0.0
    %v637 = vsel %vm331, %v629, 0.0
    %v638 = vadd.f32 %v636, %v637
    %v639 = vsel %vm331, %v630, 0.0
    %v640 = vadd.f32 %v638, %v639
    %v641 = vsel %vm331, %v631, 0.0
    %v642 = vadd.f32 %v640, %v641
    %v643 = vsel %vm331, %v632, 0.0
    %v644 = vadd.f32 %v642, %v643
    %v645 = vsel %vm331, %v633, 0.0
    %v646 = vadd.f32 %v644, %v645
    %v647 = vsel %vm331, %v634, 0.0
    %v648 = vadd.f32 %v646, %v647
    %v649 = vsel %vm331, %v635, 0.0
    %v650 = vadd.f32 %v648, %v649
    %651 = vadd.xlane.f32.xlu0 %v650
    %v652 = vpop.xlane.xlu0 %651
    %v653 = vrot.slane %v652, 4
    %v654 = vadd.f32 %v652, %v653
    %v655 = vrot.slane %v654, 2
    %v656 = vadd.f32 %v654, %v655
    %v657 = vrot.slane %v656, 1
    %v658 = vadd.f32 %v656, %v657
    %s659 = vtos %v658
    %v660 = vsub.f32 %v43, %v59
    %v661 = vsub.f32 %v44, %v60
    %v662 = vsub.f32 %v45, %v61
    %v663 = vsub.f32 %v46, %v62
    %v664 = vsub.f32 %v47, %v63
    %v665 = vsub.f32 %v48, %v64
    %v666 = vsub.f32 %v49, %v65
    %v667 = vsub.f32 %v50, %v66
    %v668 = vsub.f32 %v51, %v67
    %v669 = vsub.f32 %v52, %v68
    %v670 = vsub.f32 %v53, %v69
    %v671 = vsub.f32 %v54, %v70
    %v672 = vsub.f32 %v55, %v71
    %v673 = vsub.f32 %v56, %v72
    %v674 = vsub.f32 %v57, %v73
    %v675 = vsub.f32 %v58, %v74
    %s676 = sld [smem:[#allocation2]]
    %s677 = sadd.f32 %s676, %s355
    %s678 = scalar_lea.smem [#allocation2], 0
    %679 = sst [smem:[%s678]] %s677
    %s680 = sld [smem:[#allocation2 + $0x1]]
    %s681 = sadd.f32 %s680, %s403
    %s682 = scalar_lea.smem [#allocation2], 1
    %683 = sst [smem:[%s682]] %s681
    %s684 = sld [smem:[#allocation2 + $0x2]]
    %s685 = sadd.f32 %s684, %s611
    %s686 = scalar_lea.smem [#allocation2], 2
    %687 = sst [smem:[%s686]] %s685
    %s688 = sld [smem:[#allocation2 + $0x3]]
    %s689 = sadd.f32 %s688, %s659
    %s690 = scalar_lea.smem [#allocation2], 3
    %691 = sst [smem:[%s690]] %s689
    %s692 = sld [smem:[#allocation2 + $0x4]]
    %v693 = vmul.f32 %v660, %v660
    %v694 = vmul.f32 %v661, %v661
    %v695 = vmul.f32 %v662, %v662
    %v696 = vmul.f32 %v663, %v663
    %v697 = vmul.f32 %v664, %v664
    %v698 = vmul.f32 %v665, %v665
    %v699 = vmul.f32 %v666, %v666
    %v700 = vmul.f32 %v667, %v667
    %v701 = vadd.f32 %v693, %v694
    %v702 = vadd.f32 %v701, %v695
    %v703 = vadd.f32 %v702, %v696
    %v704 = vadd.f32 %v703, %v697
    %v705 = vadd.f32 %v704, %v698
    %v706 = vadd.f32 %v705, %v699
    %v707 = vadd.f32 %v706, %v700
    %708 = vadd.xlane.f32.xlu0 %v707
    %v709 = vpop.xlane.xlu0 %708
    %v710 = vrot.slane %v709, 4
    %v711 = vadd.f32 %v709, %v710
    %v712 = vrot.slane %v711, 2
    %v713 = vadd.f32 %v711, %v712
    %v714 = vrot.slane %v713, 1
    %v715 = vadd.f32 %v713, %v714
    %s716 = vtos %v715
    %s717 = sadd.f32 %s692, %s716
    %s718 = scalar_lea.smem [#allocation2], 4
    %719 = sst [smem:[%s718]] %s717
    %s720 = sld [smem:[#allocation2 + $0x5]]
    %v721 = vmul.f32 %v668, %v668
    %v722 = vmul.f32 %v669, %v669
    %v723 = vmul.f32 %v670, %v670
    %v724 = vmul.f32 %v671, %v671
    %v725 = vmul.f32 %v672, %v672
    %v726 = vmul.f32 %v673, %v673
    %v727 = vmul.f32 %v674, %v674
    %v728 = vmul.f32 %v675, %v675
    %v729 = vadd.f32 %v721, %v722
    %v730 = vadd.f32 %v729, %v723
    %v731 = vadd.f32 %v730, %v724
    %v732 = vadd.f32 %v731, %v725
    %v733 = vadd.f32 %v732, %v726
    %v734 = vadd.f32 %v733, %v727
    %v735 = vadd.f32 %v734, %v728
    %736 = vadd.xlane.f32.xlu0 %v735
    %v737 = vpop.xlane.xlu0 %736
    %v738 = vrot.slane %v737, 4
    %v739 = vadd.f32 %v737, %v738
    %v740 = vrot.slane %v739, 2
    %v741 = vadd.f32 %v739, %v740
    %v742 = vrot.slane %v741, 1
    %v743 = vadd.f32 %v741, %v742
    %s744 = vtos %v743
    %s745 = sadd.f32 %s720, %s744
    %s746 = scalar_lea.smem [#allocation2], 5
    %747 = sst [smem:[%s746]] %s745
    // Predicated region
    $region34: #{_lgncause_forward_impl.9} parent=1 // pred_check
      %p748 = pneg %p27
    $region35: #{_lgncause_forward_impl.9} parent=1 // pred_check_branch
      %750 = sbr.rel (%p748) target = $region37
    $region36: #{_lgncause_forward_impl.9} parent=1 // pred_region
      %s751 = sld [smem:[#allocation2]]
      %s752 = scalar_lea.smem [#allocation3], 0
      %753 = sst [smem:[%s752]] %s751
      %s754 = sld [smem:[#allocation2 + $0x1]]
      %s755 = scalar_lea.smem [#allocation3], 1
      %756 = sst [smem:[%s755]] %s754
      %s757 = sld [smem:[#allocation2 + $0x2]]
      %s758 = scalar_lea.smem [#allocation3], 2
      %759 = sst [smem:[%s758]] %s757
      %s760 = sld [smem:[#allocation2 + $0x3]]
      %s761 = scalar_lea.smem [#allocation3], 3
      %762 = sst [smem:[%s761]] %s760
      %s763 = sld [smem:[#allocation2 + $0x4]]
      %s764 = scalar_lea.smem [#allocation3], 4
      %765 = sst [smem:[%s764]] %s763
      %s766 = sld [smem:[#allocation2 + $0x5]]
      %s767 = scalar_lea.smem [#allocation3], 5
      %768 = sst [smem:[%s767]] %s766
    $region37: #{_lgncause_forward_impl.9} parent=1 // pred_fallthru
      _
    // Predicated region
    $region38: #{_lgncause_forward_impl.9} parent=1 // pred_check
      _
    $region39: #{_lgncause_forward_impl.9} parent=1 // pred_check_branch
      %770 = sbr.rel (0) target = $region41
    $region40: #{_lgncause_forward_impl.9} parent=1 // pred_region
      %772 = vsyncadd [#allocation4], 0
      %s774 = sshll.u32 %s7, 4
      %s775 = int_to_ptr.vmem [resolvable:$true] %s774
      %777 = dma.smem_to_vmem [#allocation3], 16, %s775, [#allocation4]
    $region41: #{_lgncause_forward_impl.9} parent=1 // pred_fallthru
      _
    // Predicated region
    $region42: #{_lgncause_forward_impl.9} parent=1 // pred_check
      _
    $region43: #{_lgncause_forward_impl.9} parent=1 // pred_check_branch
      %779 = sbr.rel (0) target = $region45
    $region44: #{_lgncause_forward_impl.9} parent=1 // pred_region
      %781 = dma.done [#allocation4], 16
    $region45: #{_lgncause_forward_impl.9} parent=1 // pred_fallthru
      _
    %782 = sfence
    %783 = vsyncpa [#allocation4], 1

</llo_original>
